<compile_context>
chip_gen: v5e
topology: v5e:2x2
jax: 0.10.0
libtpu: 0.0.40
codegen_flags: <defaults>
</compile_context>

<pallas_src>
import jax
import jax.numpy as jnp
from jax.experimental import pallas as pl
from jax.experimental.pallas import tpu as pltpu


def _gru_fused_kernel(x_ref, wih_ref, bgi_ref, whh_ref, bhhn_ref,
                      wfc_ref, bfc_ref, out_ref):
    """Whole GRU forward (all T steps) + final FC in one kernel invocation.

    x_ref   : (T*Bp, D)   time-major activations, batch padded to Bp
    wih_ref : (D, 3*Hp)   gate-blocked W_ih^T, each gate lane-padded to Hp
    bgi_ref : (1, 3*Hp)   b_ih + [b_hh_r, b_hh_z, 0]    (pre-folded)
    whh_ref : (Hp, 3*Hp)  gate-blocked W_hh^T
    bhhn_ref: (1, Hp)     b_hh_n (must stay inside the r * (...) term)
    wfc_ref : (Hp, Op)    W_fc^T (zero-padded)
    bfc_ref : (1, Op)
    out_ref : (Bp, Op)
    """
    Bp = out_ref.shape[0]
    Hp = whh_ref.shape[0]
    T = x_ref.shape[0] // Bp

    # Hoisted input projection: ONE matmul covering every timestep.
    gi_all = jnp.dot(x_ref[...], wih_ref[...],
                     preferred_element_type=jnp.float32) + bgi_ref[...]

    w_hh = whh_ref[...]
    b_hh_n = bhhn_ref[...]

    h = jnp.zeros((Bp, Hp), jnp.float32)
    # T is small & static -> fully unrolled recurrence, h carried in vregs.
    for t in range(T):
        gi = gi_all[t * Bp:(t + 1) * Bp, :]               # (Bp, 3Hp), aligned
        gh = jnp.dot(h, w_hh, preferred_element_type=jnp.float32)
        r = jax.nn.sigmoid(gi[:, 0 * Hp:1 * Hp] + gh[:, 0 * Hp:1 * Hp])
        z = jax.nn.sigmoid(gi[:, 1 * Hp:2 * Hp] + gh[:, 1 * Hp:2 * Hp])
        n = jnp.tanh(gi[:, 2 * Hp:3 * Hp] + r * (gh[:, 2 * Hp:3 * Hp] + b_hh_n))
        h = n + z * (h - n)                               # == (1-z)*n + z*h

    # fc on the last hidden state, lane-dense full-width store.
    out_ref[...] = (jnp.dot(h, wfc_ref[...], preferred_element_type=jnp.float32)
                    + bfc_ref[...]).astype(out_ref.dtype)


def _round_up(x, m):
    return ((x + m - 1) // m) * m


def _pad_gate_cols(w, H, Hp):
    """(..., 3H) -> (..., 3Hp): each of the 3 gate blocks zero-padded to Hp."""
    parts = []
    for g in range(3):
        blk = w[..., g * H:(g + 1) * H]
        pad = [(0, 0)] * (w.ndim - 1) + [(0, Hp - H)]
        parts.append(jnp.pad(blk, pad))
    return jnp.concatenate(parts, axis=-1)


def gru_predictor_forward(x, params):
    """x: (B, T, D) float32.  Returns (B, O) float32."""
    B, T, D = x.shape
    w_ih, w_hh, b_ih, b_hh, w_fc, b_fc = params
    H = w_hh.shape[0]
    O = w_fc.shape[1]

    Bp = _round_up(B, 8)       # sublane-aligned batch
    Hp = _round_up(H, 128)     # lane-aligned gates / hidden
    Op = _round_up(O, 128)     # lane-dense output store

    # ---- one-time layout plumbing (outside the kernel) ----
    x_tm = jnp.transpose(x, (1, 0, 2))                        # (T, B, D)
    x_tm = jnp.pad(x_tm, ((0, 0), (0, Bp - B), (0, 0)))       # (T, Bp, D)
    x2 = x_tm.reshape(T * Bp, D)                              # (T*Bp, D)

    w_ih_p = _pad_gate_cols(w_ih, H, Hp)                      # (D, 3Hp)
    w_hh_p = jnp.pad(_pad_gate_cols(w_hh, H, Hp), ((0, Hp - H), (0, 0)))
    b_ih_p = _pad_gate_cols(b_ih, H, Hp)                      # (1, 3Hp)
    b_hh_p = _pad_gate_cols(b_hh, H, Hp)                      # (1, 3Hp)
    # Fold b_hh for the r/z gates into the hoisted input-projection bias.
    b_gi = b_ih_p + jnp.concatenate(
        [b_hh_p[:, :2 * Hp], jnp.zeros((1, Hp), jnp.float32)], axis=-1)
    b_hh_n = b_hh_p[:, 2 * Hp:]                               # (1, Hp)
    w_fc_p = jnp.pad(w_fc, ((0, Hp - H), (0, Op - O)))        # (Hp, Op)
    b_fc_p = jnp.pad(b_fc, ((0, 0), (0, Op - O)))             # (1, Op)

    full2d = lambda i: (0, 0)
    out_p = pl.pallas_call(
        _gru_fused_kernel,
        out_shape=jax.ShapeDtypeStruct((Bp, Op), jnp.float32),
        grid=(1,),
        in_specs=[
            pl.BlockSpec((T * Bp, D), full2d),    # all timesteps resident
            pl.BlockSpec((D, 3 * Hp), full2d),    # W_ih^T (gate-padded)
            pl.BlockSpec((1, 3 * Hp), full2d),    # folded input bias
            pl.BlockSpec((Hp, 3 * Hp), full2d),   # W_hh^T (gate-padded)
            pl.BlockSpec((1, Hp), full2d),        # b_hh_n
            pl.BlockSpec((Hp, Op), full2d),       # W_fc^T
            pl.BlockSpec((1, Op), full2d),        # b_fc
        ],
        out_specs=pl.BlockSpec((Bp, Op), full2d),
        compiler_params=pltpu.CompilerParams(
            dimension_semantics=("arbitrary",)),
    )(x2, w_ih_p, b_gi, w_hh_p, b_hh_n, w_fc_p, b_fc_p)

    return out_p[:B, :O]


def gru_predictor_reference(x, params):
    """Pure-JAX reference mirroring PyTorch nn.GRU + nn.Linear semantics."""
    w_ih, w_hh, b_ih, b_hh, w_fc, b_fc = params
    B, T, D = x.shape
    H = w_hh.shape[0]
    h = jnp.zeros((B, H), jnp.float32)
    for t in range(T):
        x_t = x[:, t, :]
        gi = x_t @ w_ih + b_ih
        gh = h @ w_hh + b_hh
        r = jax.nn.sigmoid(gi[:, :H] + gh[:, :H])
        z = jax.nn.sigmoid(gi[:, H:2 * H] + gh[:, H:2 * H])
        n = jnp.tanh(gi[:, 2 * H:] + r * gh[:, 2 * H:])
        h = (1.0 - z) * n + z * h
    return h @ w_fc + b_fc


def init_params(key, input_size, hidden_size, output_size):
    """Deterministic synthetic parameters (PyTorch-shaped, pre-transposed)."""
    ks = jax.random.split(key, 6)
    scale = 1.0 / jnp.sqrt(hidden_size)
    # PyTorch stores weight_ih_l0 as (3H, D); we pass its transpose (D, 3H).
    w_ih = jax.random.uniform(ks[0], (input_size, 3 * hidden_size),
                              jnp.float32, -scale, scale)
    w_hh = jax.random.uniform(ks[1], (hidden_size, 3 * hidden_size),
                              jnp.float32, -scale, scale)
    b_ih = jax.random.uniform(ks[2], (1, 3 * hidden_size),
                              jnp.float32, -scale, scale)
    b_hh = jax.random.uniform(ks[3], (1, 3 * hidden_size),
                              jnp.float32, -scale, scale)
    w_fc = jax.random.uniform(ks[4], (hidden_size, output_size),
                              jnp.float32, -scale, scale)
    b_fc = jax.random.uniform(ks[5], (1, output_size),
                              jnp.float32, -scale, scale)
    return (w_ih, w_hh, b_ih, b_hh, w_fc, b_fc)


if __name__ == "__main__":
    B, T, D, H, O = 2, 8, 4, 32, 4   # batch, seq, input_size, hidden, output
    key = jax.random.PRNGKey(0)
    kx, kp = jax.random.split(key)
    x = jax.random.normal(kx, (B, T, D), jnp.float32)
    params = init_params(kp, D, H, O)

    out = jax.block_until_ready(gru_predictor_forward(x, params))
    ref = jax.block_until_ready(gru_predictor_reference(x, params))

    assert out.shape == (B, O)
    assert jnp.allclose(out, ref, atol=1e-4, rtol=1e-4), (out, ref)
    print("KERNEL_OK")
</pallas_src>

<mosaic_0001>
module attributes {stable_mosaic.version = 11 : i64} {
  func.func @_gru_fused_kernel(%arg0: i32, %arg1: memref<64x4xf32, #tpu.memory_space<vmem>>, %arg2: memref<4x384xf32, #tpu.memory_space<vmem>>, %arg3: memref<1x384xf32, #tpu.memory_space<vmem>>, %arg4: memref<128x384xf32, #tpu.memory_space<vmem>>, %arg5: memref<1x128xf32, #tpu.memory_space<vmem>>, %arg6: memref<128x128xf32, #tpu.memory_space<vmem>>, %arg7: memref<1x128xf32, #tpu.memory_space<vmem>>, %arg8: memref<8x128xf32, #tpu.memory_space<vmem>>) attributes {dimension_semantics = [#tpu.dimension_semantics<arbitrary>], iteration_bounds = array<i64: 1>, scalar_prefetch = 0 : i64, scratch_operands = 0 : i64, tpu.core_type = #tpu.core_type<tc>, window_params = [{pipeline_mode = #tpu.pipeline_mode<synchronous>, transform_indices = @transform_0, window_bounds = array<i64: 64, 4>}, {pipeline_mode = #tpu.pipeline_mode<synchronous>, transform_indices = @transform_1, window_bounds = array<i64: 4, 384>}, {pipeline_mode = #tpu.pipeline_mode<synchronous>, transform_indices = @transform_2, window_bounds = array<i64: 1, 384>}, {pipeline_mode = #tpu.pipeline_mode<synchronous>, transform_indices = @transform_3, window_bounds = array<i64: 128, 384>}, {pipeline_mode = #tpu.pipeline_mode<synchronous>, transform_indices = @transform_4, window_bounds = array<i64: 1, 128>}, {pipeline_mode = #tpu.pipeline_mode<synchronous>, transform_indices = @transform_5, window_bounds = array<i64: 128, 128>}, {pipeline_mode = #tpu.pipeline_mode<synchronous>, transform_indices = @transform_6, window_bounds = array<i64: 1, 128>}, {pipeline_mode = #tpu.pipeline_mode<synchronous>, transform_indices = @transform_7, window_bounds = array<i64: 8, 128>}]} {
    %c0 = arith.constant 0 : index
    %c0_0 = arith.constant 0 : index
    %0 = vector.load %arg1[%c0, %c0_0] : memref<64x4xf32, #tpu.memory_space<vmem>>, vector<64x4xf32>
    %c0_1 = arith.constant 0 : index
    %c0_2 = arith.constant 0 : index
    %1 = vector.load %arg2[%c0_1, %c0_2] : memref<4x384xf32, #tpu.memory_space<vmem>>, vector<4x384xf32>
    %cst = arith.constant dense<0.000000e+00> : vector<64x384xf32>
    %2 = tpu.matmul %0, %1, %cst {dimension_numbers = #tpu.dot_dimension_numbers<[1], [0], [0], [1], [0, 0, 1, 1], [], []>} : vector<64x4xf32>, vector<4x384xf32>, vector<64x384xf32> -> vector<64x384xf32>
    %c0_3 = arith.constant 0 : index
    %c0_4 = arith.constant 0 : index
    %3 = vector.load %arg3[%c0_3, %c0_4] : memref<1x384xf32, #tpu.memory_space<vmem>>, vector<1x384xf32>
    %4 = vector.broadcast %3 : vector<1x384xf32> to vector<64x384xf32>
    %5 = arith.addf %2, %4 : vector<64x384xf32>
    %c0_5 = arith.constant 0 : index
    %c0_6 = arith.constant 0 : index
    %6 = vector.load %arg4[%c0_5, %c0_6] : memref<128x384xf32, #tpu.memory_space<vmem>>, vector<128x384xf32>
    %c0_7 = arith.constant 0 : index
    %c0_8 = arith.constant 0 : index
    %7 = vector.load %arg5[%c0_7, %c0_8] : memref<1x128xf32, #tpu.memory_space<vmem>>, vector<1x128xf32>
    %cst_9 = arith.constant 0.000000e+00 : f32
    %8 = vector.broadcast %cst_9 : f32 to vector<8x128xf32>
    %9 = vector.extract_strided_slice %5 {offsets = [0, 0], sizes = [8, 384], strides = [1, 1]} : vector<64x384xf32> to vector<8x384xf32>
    %cst_10 = arith.constant dense<0.000000e+00> : vector<8x384xf32>
    %10 = tpu.matmul %8, %6, %cst_10 {dimension_numbers = #tpu.dot_dimension_numbers<[1], [0], [0], [1], [0, 0, 1, 1], [], []>} : vector<8x128xf32>, vector<128x384xf32>, vector<8x384xf32> -> vector<8x384xf32>
    %11 = vector.extract_strided_slice %9 {offsets = [0, 0], sizes = [8, 128], strides = [1, 1]} : vector<8x384xf32> to vector<8x128xf32>
    %12 = vector.extract_strided_slice %10 {offsets = [0, 0], sizes = [8, 128], strides = [1, 1]} : vector<8x384xf32> to vector<8x128xf32>
    %13 = arith.addf %11, %12 : vector<8x128xf32>
    %14 = arith.negf %13 : vector<8x128xf32>
    %15 = math.exp %14 : vector<8x128xf32>
    %cst_11 = arith.constant 1.000000e+00 : f32
    %16 = vector.broadcast %cst_11 : f32 to vector<8x128xf32>
    %17 = arith.addf %16, %15 : vector<8x128xf32>
    %18 = arith.divf %16, %17 : vector<8x128xf32>
    %19 = vector.extract_strided_slice %9 {offsets = [0, 128], sizes = [8, 128], strides = [1, 1]} : vector<8x384xf32> to vector<8x128xf32>
    %20 = vector.extract_strided_slice %10 {offsets = [0, 128], sizes = [8, 128], strides = [1, 1]} : vector<8x384xf32> to vector<8x128xf32>
    %21 = arith.addf %19, %20 : vector<8x128xf32>
    %22 = arith.negf %21 : vector<8x128xf32>
    %23 = math.exp %22 : vector<8x128xf32>
    %cst_12 = arith.constant 1.000000e+00 : f32
    %24 = vector.broadcast %cst_12 : f32 to vector<8x128xf32>
    %25 = arith.addf %24, %23 : vector<8x128xf32>
    %26 = arith.divf %24, %25 : vector<8x128xf32>
    %27 = vector.extract_strided_slice %9 {offsets = [0, 256], sizes = [8, 128], strides = [1, 1]} : vector<8x384xf32> to vector<8x128xf32>
    %28 = vector.extract_strided_slice %10 {offsets = [0, 256], sizes = [8, 128], strides = [1, 1]} : vector<8x384xf32> to vector<8x128xf32>
    %29 = vector.broadcast %7 : vector<1x128xf32> to vector<8x128xf32>
    %30 = arith.addf %28, %29 : vector<8x128xf32>
    %31 = arith.mulf %18, %30 : vector<8x128xf32>
    %32 = arith.addf %27, %31 : vector<8x128xf32>
    %33 = math.tanh %32 : vector<8x128xf32>
    %34 = arith.subf %8, %33 : vector<8x128xf32>
    %35 = arith.mulf %26, %34 : vector<8x128xf32>
    %36 = arith.addf %33, %35 : vector<8x128xf32>
    %37 = vector.extract_strided_slice %5 {offsets = [8, 0], sizes = [8, 384], strides = [1, 1]} : vector<64x384xf32> to vector<8x384xf32>
    %cst_13 = arith.constant dense<0.000000e+00> : vector<8x384xf32>
    %38 = tpu.matmul %36, %6, %cst_13 {dimension_numbers = #tpu.dot_dimension_numbers<[1], [0], [0], [1], [0, 0, 1, 1], [], []>} : vector<8x128xf32>, vector<128x384xf32>, vector<8x384xf32> -> vector<8x384xf32>
    %39 = vector.extract_strided_slice %37 {offsets = [0, 0], sizes = [8, 128], strides = [1, 1]} : vector<8x384xf32> to vector<8x128xf32>
    %40 = vector.extract_strided_slice %38 {offsets = [0, 0], sizes = [8, 128], strides = [1, 1]} : vector<8x384xf32> to vector<8x128xf32>
    %41 = arith.addf %39, %40 : vector<8x128xf32>
    %42 = arith.negf %41 : vector<8x128xf32>
    %43 = math.exp %42 : vector<8x128xf32>
    %cst_14 = arith.constant 1.000000e+00 : f32
    %44 = vector.broadcast %cst_14 : f32 to vector<8x128xf32>
    %45 = arith.addf %44, %43 : vector<8x128xf32>
    %46 = arith.divf %44, %45 : vector<8x128xf32>
    %47 = vector.extract_strided_slice %37 {offsets = [0, 128], sizes = [8, 128], strides = [1, 1]} : vector<8x384xf32> to vector<8x128xf32>
    %48 = vector.extract_strided_slice %38 {offsets = [0, 128], sizes = [8, 128], strides = [1, 1]} : vector<8x384xf32> to vector<8x128xf32>
    %49 = arith.addf %47, %48 : vector<8x128xf32>
    %50 = arith.negf %49 : vector<8x128xf32>
    %51 = math.exp %50 : vector<8x128xf32>
    %cst_15 = arith.constant 1.000000e+00 : f32
    %52 = vector.broadcast %cst_15 : f32 to vector<8x128xf32>
    %53 = arith.addf %52, %51 : vector<8x128xf32>
    %54 = arith.divf %52, %53 : vector<8x128xf32>
    %55 = vector.extract_strided_slice %37 {offsets = [0, 256], sizes = [8, 128], strides = [1, 1]} : vector<8x384xf32> to vector<8x128xf32>
    %56 = vector.extract_strided_slice %38 {offsets = [0, 256], sizes = [8, 128], strides = [1, 1]} : vector<8x384xf32> to vector<8x128xf32>
    %57 = vector.broadcast %7 : vector<1x128xf32> to vector<8x128xf32>
    %58 = arith.addf %56, %57 : vector<8x128xf32>
    %59 = arith.mulf %46, %58 : vector<8x128xf32>
    %60 = arith.addf %55, %59 : vector<8x128xf32>
    %61 = math.tanh %60 : vector<8x128xf32>
    %62 = arith.subf %36, %61 : vector<8x128xf32>
    %63 = arith.mulf %54, %62 : vector<8x128xf32>
    %64 = arith.addf %61, %63 : vector<8x128xf32>
    %65 = vector.extract_strided_slice %5 {offsets = [16, 0], sizes = [8, 384], strides = [1, 1]} : vector<64x384xf32> to vector<8x384xf32>
    %cst_16 = arith.constant dense<0.000000e+00> : vector<8x384xf32>
    %66 = tpu.matmul %64, %6, %cst_16 {dimension_numbers = #tpu.dot_dimension_numbers<[1], [0], [0], [1], [0, 0, 1, 1], [], []>} : vector<8x128xf32>, vector<128x384xf32>, vector<8x384xf32> -> vector<8x384xf32>
    %67 = vector.extract_strided_slice %65 {offsets = [0, 0], sizes = [8, 128], strides = [1, 1]} : vector<8x384xf32> to vector<8x128xf32>
    %68 = vector.extract_strided_slice %66 {offsets = [0, 0], sizes = [8, 128], strides = [1, 1]} : vector<8x384xf32> to vector<8x128xf32>
    %69 = arith.addf %67, %68 : vector<8x128xf32>
    %70 = arith.negf %69 : vector<8x128xf32>
    %71 = math.exp %70 : vector<8x128xf32>
    %cst_17 = arith.constant 1.000000e+00 : f32
    %72 = vector.broadcast %cst_17 : f32 to vector<8x128xf32>
    %73 = arith.addf %72, %71 : vector<8x128xf32>
    %74 = arith.divf %72, %73 : vector<8x128xf32>
    %75 = vector.extract_strided_slice %65 {offsets = [0, 128], sizes = [8, 128], strides = [1, 1]} : vector<8x384xf32> to vector<8x128xf32>
    %76 = vector.extract_strided_slice %66 {offsets = [0, 128], sizes = [8, 128], strides = [1, 1]} : vector<8x384xf32> to vector<8x128xf32>
    %77 = arith.addf %75, %76 : vector<8x128xf32>
    %78 = arith.negf %77 : vector<8x128xf32>
    %79 = math.exp %78 : vector<8x128xf32>
    %cst_18 = arith.constant 1.000000e+00 : f32
    %80 = vector.broadcast %cst_18 : f32 to vector<8x128xf32>
    %81 = arith.addf %80, %79 : vector<8x128xf32>
    %82 = arith.divf %80, %81 : vector<8x128xf32>
    %83 = vector.extract_strided_slice %65 {offsets = [0, 256], sizes = [8, 128], strides = [1, 1]} : vector<8x384xf32> to vector<8x128xf32>
    %84 = vector.extract_strided_slice %66 {offsets = [0, 256], sizes = [8, 128], strides = [1, 1]} : vector<8x384xf32> to vector<8x128xf32>
    %85 = vector.broadcast %7 : vector<1x128xf32> to vector<8x128xf32>
    %86 = arith.addf %84, %85 : vector<8x128xf32>
    %87 = arith.mulf %74, %86 : vector<8x128xf32>
    %88 = arith.addf %83, %87 : vector<8x128xf32>
    %89 = math.tanh %88 : vector<8x128xf32>
    %90 = arith.subf %64, %89 : vector<8x128xf32>
    %91 = arith.mulf %82, %90 : vector<8x128xf32>
    %92 = arith.addf %89, %91 : vector<8x128xf32>
    %93 = vector.extract_strided_slice %5 {offsets = [24, 0], sizes = [8, 384], strides = [1, 1]} : vector<64x384xf32> to vector<8x384xf32>
    %cst_19 = arith.constant dense<0.000000e+00> : vector<8x384xf32>
    %94 = tpu.matmul %92, %6, %cst_19 {dimension_numbers = #tpu.dot_dimension_numbers<[1], [0], [0], [1], [0, 0, 1, 1], [], []>} : vector<8x128xf32>, vector<128x384xf32>, vector<8x384xf32> -> vector<8x384xf32>
    %95 = vector.extract_strided_slice %93 {offsets = [0, 0], sizes = [8, 128], strides = [1, 1]} : vector<8x384xf32> to vector<8x128xf32>
    %96 = vector.extract_strided_slice %94 {offsets = [0, 0], sizes = [8, 128], strides = [1, 1]} : vector<8x384xf32> to vector<8x128xf32>
    %97 = arith.addf %95, %96 : vector<8x128xf32>
    %98 = arith.negf %97 : vector<8x128xf32>
    %99 = math.exp %98 : vector<8x128xf32>
    %cst_20 = arith.constant 1.000000e+00 : f32
    %100 = vector.broadcast %cst_20 : f32 to vector<8x128xf32>
    %101 = arith.addf %100, %99 : vector<8x128xf32>
    %102 = arith.divf %100, %101 : vector<8x128xf32>
    %103 = vector.extract_strided_slice %93 {offsets = [0, 128], sizes = [8, 128], strides = [1, 1]} : vector<8x384xf32> to vector<8x128xf32>
    %104 = vector.extract_strided_slice %94 {offsets = [0, 128], sizes = [8, 128], strides = [1, 1]} : vector<8x384xf32> to vector<8x128xf32>
    %105 = arith.addf %103, %104 : vector<8x128xf32>
    %106 = arith.negf %105 : vector<8x128xf32>
    %107 = math.exp %106 : vector<8x128xf32>
    %cst_21 = arith.constant 1.000000e+00 : f32
    %108 = vector.broadcast %cst_21 : f32 to vector<8x128xf32>
    %109 = arith.addf %108, %107 : vector<8x128xf32>
    %110 = arith.divf %108, %109 : vector<8x128xf32>
    %111 = vector.extract_strided_slice %93 {offsets = [0, 256], sizes = [8, 128], strides = [1, 1]} : vector<8x384xf32> to vector<8x128xf32>
    %112 = vector.extract_strided_slice %94 {offsets = [0, 256], sizes = [8, 128], strides = [1, 1]} : vector<8x384xf32> to vector<8x128xf32>
    %113 = vector.broadcast %7 : vector<1x128xf32> to vector<8x128xf32>
    %114 = arith.addf %112, %113 : vector<8x128xf32>
    %115 = arith.mulf %102, %114 : vector<8x128xf32>
    %116 = arith.addf %111, %115 : vector<8x128xf32>
    %117 = math.tanh %116 : vector<8x128xf32>
    %118 = arith.subf %92, %117 : vector<8x128xf32>
    %119 = arith.mulf %110, %118 : vector<8x128xf32>
    %120 = arith.addf %117, %119 : vector<8x128xf32>
    %121 = vector.extract_strided_slice %5 {offsets = [32, 0], sizes = [8, 384], strides = [1, 1]} : vector<64x384xf32> to vector<8x384xf32>
    %cst_22 = arith.constant dense<0.000000e+00> : vector<8x384xf32>
    %122 = tpu.matmul %120, %6, %cst_22 {dimension_numbers = #tpu.dot_dimension_numbers<[1], [0], [0], [1], [0, 0, 1, 1], [], []>} : vector<8x128xf32>, vector<128x384xf32>, vector<8x384xf32> -> vector<8x384xf32>
    %123 = vector.extract_strided_slice %121 {offsets = [0, 0], sizes = [8, 128], strides = [1, 1]} : vector<8x384xf32> to vector<8x128xf32>
    %124 = vector.extract_strided_slice %122 {offsets = [0, 0], sizes = [8, 128], strides = [1, 1]} : vector<8x384xf32> to vector<8x128xf32>
    %125 = arith.addf %123, %124 : vector<8x128xf32>
    %126 = arith.negf %125 : vector<8x128xf32>
    %127 = math.exp %126 : vector<8x128xf32>
    %cst_23 = arith.constant 1.000000e+00 : f32
    %128 = vector.broadcast %cst_23 : f32 to vector<8x128xf32>
    %129 = arith.addf %128, %127 : vector<8x128xf32>
    %130 = arith.divf %128, %129 : vector<8x128xf32>
    %131 = vector.extract_strided_slice %121 {offsets = [0, 128], sizes = [8, 128], strides = [1, 1]} : vector<8x384xf32> to vector<8x128xf32>
    %132 = vector.extract_strided_slice %122 {offsets = [0, 128], sizes = [8, 128], strides = [1, 1]} : vector<8x384xf32> to vector<8x128xf32>
    %133 = arith.addf %131, %132 : vector<8x128xf32>
    %134 = arith.negf %133 : vector<8x128xf32>
    %135 = math.exp %134 : vector<8x128xf32>
    %cst_24 = arith.constant 1.000000e+00 : f32
    %136 = vector.broadcast %cst_24 : f32 to vector<8x128xf32>
    %137 = arith.addf %136, %135 : vector<8x128xf32>
    %138 = arith.divf %136, %137 : vector<8x128xf32>
    %139 = vector.extract_strided_slice %121 {offsets = [0, 256], sizes = [8, 128], strides = [1, 1]} : vector<8x384xf32> to vector<8x128xf32>
    %140 = vector.extract_strided_slice %122 {offsets = [0, 256], sizes = [8, 128], strides = [1, 1]} : vector<8x384xf32> to vector<8x128xf32>
    %141 = vector.broadcast %7 : vector<1x128xf32> to vector<8x128xf32>
    %142 = arith.addf %140, %141 : vector<8x128xf32>
    %143 = arith.mulf %130, %142 : vector<8x128xf32>
    %144 = arith.addf %139, %143 : vector<8x128xf32>
    %145 = math.tanh %144 : vector<8x128xf32>
    %146 = arith.subf %120, %145 : vector<8x128xf32>
    %147 = arith.mulf %138, %146 : vector<8x128xf32>
    %148 = arith.addf %145, %147 : vector<8x128xf32>
    %149 = vector.extract_strided_slice %5 {offsets = [40, 0], sizes = [8, 384], strides = [1, 1]} : vector<64x384xf32> to vector<8x384xf32>
    %cst_25 = arith.constant dense<0.000000e+00> : vector<8x384xf32>
    %150 = tpu.matmul %148, %6, %cst_25 {dimension_numbers = #tpu.dot_dimension_numbers<[1], [0], [0], [1], [0, 0, 1, 1], [], []>} : vector<8x128xf32>, vector<128x384xf32>, vector<8x384xf32> -> vector<8x384xf32>
    %151 = vector.extract_strided_slice %149 {offsets = [0, 0], sizes = [8, 128], strides = [1, 1]} : vector<8x384xf32> to vector<8x128xf32>
    %152 = vector.extract_strided_slice %150 {offsets = [0, 0], sizes = [8, 128], strides = [1, 1]} : vector<8x384xf32> to vector<8x128xf32>
    %153 = arith.addf %151, %152 : vector<8x128xf32>
    %154 = arith.negf %153 : vector<8x128xf32>
    %155 = math.exp %154 : vector<8x128xf32>
    %cst_26 = arith.constant 1.000000e+00 : f32
    %156 = vector.broadcast %cst_26 : f32 to vector<8x128xf32>
    %157 = arith.addf %156, %155 : vector<8x128xf32>
    %158 = arith.divf %156, %157 : vector<8x128xf32>
    %159 = vector.extract_strided_slice %149 {offsets = [0, 128], sizes = [8, 128], strides = [1, 1]} : vector<8x384xf32> to vector<8x128xf32>
    %160 = vector.extract_strided_slice %150 {offsets = [0, 128], sizes = [8, 128], strides = [1, 1]} : vector<8x384xf32> to vector<8x128xf32>
    %161 = arith.addf %159, %160 : vector<8x128xf32>
    %162 = arith.negf %161 : vector<8x128xf32>
    %163 = math.exp %162 : vector<8x128xf32>
    %cst_27 = arith.constant 1.000000e+00 : f32
    %164 = vector.broadcast %cst_27 : f32 to vector<8x128xf32>
    %165 = arith.addf %164, %163 : vector<8x128xf32>
    %166 = arith.divf %164, %165 : vector<8x128xf32>
    %167 = vector.extract_strided_slice %149 {offsets = [0, 256], sizes = [8, 128], strides = [1, 1]} : vector<8x384xf32> to vector<8x128xf32>
    %168 = vector.extract_strided_slice %150 {offsets = [0, 256], sizes = [8, 128], strides = [1, 1]} : vector<8x384xf32> to vector<8x128xf32>
    %169 = vector.broadcast %7 : vector<1x128xf32> to vector<8x128xf32>
    %170 = arith.addf %168, %169 : vector<8x128xf32>
    %171 = arith.mulf %158, %170 : vector<8x128xf32>
    %172 = arith.addf %167, %171 : vector<8x128xf32>
    %173 = math.tanh %172 : vector<8x128xf32>
    %174 = arith.subf %148, %173 : vector<8x128xf32>
    %175 = arith.mulf %166, %174 : vector<8x128xf32>
    %176 = arith.addf %173, %175 : vector<8x128xf32>
    %177 = vector.extract_strided_slice %5 {offsets = [48, 0], sizes = [8, 384], strides = [1, 1]} : vector<64x384xf32> to vector<8x384xf32>
    %cst_28 = arith.constant dense<0.000000e+00> : vector<8x384xf32>
    %178 = tpu.matmul %176, %6, %cst_28 {dimension_numbers = #tpu.dot_dimension_numbers<[1], [0], [0], [1], [0, 0, 1, 1], [], []>} : vector<8x128xf32>, vector<128x384xf32>, vector<8x384xf32> -> vector<8x384xf32>
    %179 = vector.extract_strided_slice %177 {offsets = [0, 0], sizes = [8, 128], strides = [1, 1]} : vector<8x384xf32> to vector<8x128xf32>
    %180 = vector.extract_strided_slice %178 {offsets = [0, 0], sizes = [8, 128], strides = [1, 1]} : vector<8x384xf32> to vector<8x128xf32>
    %181 = arith.addf %179, %180 : vector<8x128xf32>
    %182 = arith.negf %181 : vector<8x128xf32>
    %183 = math.exp %182 : vector<8x128xf32>
    %cst_29 = arith.constant 1.000000e+00 : f32
    %184 = vector.broadcast %cst_29 : f32 to vector<8x128xf32>
    %185 = arith.addf %184, %183 : vector<8x128xf32>
    %186 = arith.divf %184, %185 : vector<8x128xf32>
    %187 = vector.extract_strided_slice %177 {offsets = [0, 128], sizes = [8, 128], strides = [1, 1]} : vector<8x384xf32> to vector<8x128xf32>
    %188 = vector.extract_strided_slice %178 {offsets = [0, 128], sizes = [8, 128], strides = [1, 1]} : vector<8x384xf32> to vector<8x128xf32>
    %189 = arith.addf %187, %188 : vector<8x128xf32>
    %190 = arith.negf %189 : vector<8x128xf32>
    %191 = math.exp %190 : vector<8x128xf32>
    %cst_30 = arith.constant 1.000000e+00 : f32
    %192 = vector.broadcast %cst_30 : f32 to vector<8x128xf32>
    %193 = arith.addf %192, %191 : vector<8x128xf32>
    %194 = arith.divf %192, %193 : vector<8x128xf32>
    %195 = vector.extract_strided_slice %177 {offsets = [0, 256], sizes = [8, 128], strides = [1, 1]} : vector<8x384xf32> to vector<8x128xf32>
    %196 = vector.extract_strided_slice %178 {offsets = [0, 256], sizes = [8, 128], strides = [1, 1]} : vector<8x384xf32> to vector<8x128xf32>
    %197 = vector.broadcast %7 : vector<1x128xf32> to vector<8x128xf32>
    %198 = arith.addf %196, %197 : vector<8x128xf32>
    %199 = arith.mulf %186, %198 : vector<8x128xf32>
    %200 = arith.addf %195, %199 : vector<8x128xf32>
    %201 = math.tanh %200 : vector<8x128xf32>
    %202 = arith.subf %176, %201 : vector<8x128xf32>
    %203 = arith.mulf %194, %202 : vector<8x128xf32>
    %204 = arith.addf %201, %203 : vector<8x128xf32>
    %205 = vector.extract_strided_slice %5 {offsets = [56, 0], sizes = [8, 384], strides = [1, 1]} : vector<64x384xf32> to vector<8x384xf32>
    %cst_31 = arith.constant dense<0.000000e+00> : vector<8x384xf32>
    %206 = tpu.matmul %204, %6, %cst_31 {dimension_numbers = #tpu.dot_dimension_numbers<[1], [0], [0], [1], [0, 0, 1, 1], [], []>} : vector<8x128xf32>, vector<128x384xf32>, vector<8x384xf32> -> vector<8x384xf32>
    %207 = vector.extract_strided_slice %205 {offsets = [0, 0], sizes = [8, 128], strides = [1, 1]} : vector<8x384xf32> to vector<8x128xf32>
    %208 = vector.extract_strided_slice %206 {offsets = [0, 0], sizes = [8, 128], strides = [1, 1]} : vector<8x384xf32> to vector<8x128xf32>
    %209 = arith.addf %207, %208 : vector<8x128xf32>
    %210 = arith.negf %209 : vector<8x128xf32>
    %211 = math.exp %210 : vector<8x128xf32>
    %cst_32 = arith.constant 1.000000e+00 : f32
    %212 = vector.broadcast %cst_32 : f32 to vector<8x128xf32>
    %213 = arith.addf %212, %211 : vector<8x128xf32>
    %214 = arith.divf %212, %213 : vector<8x128xf32>
    %215 = vector.extract_strided_slice %205 {offsets = [0, 128], sizes = [8, 128], strides = [1, 1]} : vector<8x384xf32> to vector<8x128xf32>
    %216 = vector.extract_strided_slice %206 {offsets = [0, 128], sizes = [8, 128], strides = [1, 1]} : vector<8x384xf32> to vector<8x128xf32>
    %217 = arith.addf %215, %216 : vector<8x128xf32>
    %218 = arith.negf %217 : vector<8x128xf32>
    %219 = math.exp %218 : vector<8x128xf32>
    %cst_33 = arith.constant 1.000000e+00 : f32
    %220 = vector.broadcast %cst_33 : f32 to vector<8x128xf32>
    %221 = arith.addf %220, %219 : vector<8x128xf32>
    %222 = arith.divf %220, %221 : vector<8x128xf32>
    %223 = vector.extract_strided_slice %205 {offsets = [0, 256], sizes = [8, 128], strides = [1, 1]} : vector<8x384xf32> to vector<8x128xf32>
    %224 = vector.extract_strided_slice %206 {offsets = [0, 256], sizes = [8, 128], strides = [1, 1]} : vector<8x384xf32> to vector<8x128xf32>
    %225 = vector.broadcast %7 : vector<1x128xf32> to vector<8x128xf32>
    %226 = arith.addf %224, %225 : vector<8x128xf32>
    %227 = arith.mulf %214, %226 : vector<8x128xf32>
    %228 = arith.addf %223, %227 : vector<8x128xf32>
    %229 = math.tanh %228 : vector<8x128xf32>
    %230 = arith.subf %204, %229 : vector<8x128xf32>
    %231 = arith.mulf %222, %230 : vector<8x128xf32>
    %232 = arith.addf %229, %231 : vector<8x128xf32>
    %c0_34 = arith.constant 0 : index
    %c0_35 = arith.constant 0 : index
    %233 = vector.load %arg6[%c0_34, %c0_35] : memref<128x128xf32, #tpu.memory_space<vmem>>, vector<128x128xf32>
    %cst_36 = arith.constant dense<0.000000e+00> : vector<8x128xf32>
    %234 = tpu.matmul %232, %233, %cst_36 {dimension_numbers = #tpu.dot_dimension_numbers<[1], [0], [0], [1], [0, 0, 1, 1], [], []>} : vector<8x128xf32>, vector<128x128xf32>, vector<8x128xf32> -> vector<8x128xf32>
    %c0_37 = arith.constant 0 : index
    %c0_38 = arith.constant 0 : index
    %235 = vector.load %arg7[%c0_37, %c0_38] : memref<1x128xf32, #tpu.memory_space<vmem>>, vector<1x128xf32>
    %236 = vector.broadcast %235 : vector<1x128xf32> to vector<8x128xf32>
    %237 = arith.addf %234, %236 : vector<8x128xf32>
    %c0_39 = arith.constant 0 : index
    %c0_40 = arith.constant 0 : index
    %238 = vector.load %arg8[%c0_39, %c0_40] : memref<8x128xf32, #tpu.memory_space<vmem>>, vector<8x128xf32>
    tpu.vector_store %arg8[%c0_39, %c0_40], %237 {strides = array<i32>} : memref<8x128xf32, #tpu.memory_space<vmem>>, vector<8x128xf32>,
    return
  }
  func.func @transform_0(%arg0: i32) -> (i32, i32) {
    %c0_i32 = arith.constant 0 : i32
    %c0_i32_0 = arith.constant 0 : i32
    %c0_i32_1 = arith.constant 0 : i32
    return %c0_i32, %c0_i32_0 : i32, i32
  }
  func.func @transform_1(%arg0: i32) -> (i32, i32) {
    %c0_i32 = arith.constant 0 : i32
    %c0_i32_0 = arith.constant 0 : i32
    %c0_i32_1 = arith.constant 0 : i32
    return %c0_i32, %c0_i32_0 : i32, i32
  }
  func.func @transform_2(%arg0: i32) -> (i32, i32) {
    %c0_i32 = arith.constant 0 : i32
    %c0_i32_0 = arith.constant 0 : i32
    %c0_i32_1 = arith.constant 0 : i32
    return %c0_i32, %c0_i32_0 : i32, i32
  }
  func.func @transform_3(%arg0: i32) -> (i32, i32) {
    %c0_i32 = arith.constant 0 : i32
    %c0_i32_0 = arith.constant 0 : i32
    %c0_i32_1 = arith.constant 0 : i32
    return %c0_i32, %c0_i32_0 : i32, i32
  }
  func.func @transform_4(%arg0: i32) -> (i32, i32) {
    %c0_i32 = arith.constant 0 : i32
    %c0_i32_0 = arith.constant 0 : i32
    %c0_i32_1 = arith.constant 0 : i32
    return %c0_i32, %c0_i32_0 : i32, i32
  }
  func.func @transform_5(%arg0: i32) -> (i32, i32) {
    %c0_i32 = arith.constant 0 : i32
    %c0_i32_0 = arith.constant 0 : i32
    %c0_i32_1 = arith.constant 0 : i32
    return %c0_i32, %c0_i32_0 : i32, i32
  }
  func.func @transform_6(%arg0: i32) -> (i32, i32) {
    %c0_i32 = arith.constant 0 : i32
    %c0_i32_0 = arith.constant 0 : i32
    %c0_i32_1 = arith.constant 0 : i32
    return %c0_i32, %c0_i32_0 : i32, i32
  }
  func.func @transform_7(%arg0: i32) -> (i32, i32) {
    %c0_i32 = arith.constant 0 : i32
    %c0_i32_0 = arith.constant 0 : i32
    %c0_i32_1 = arith.constant 0 : i32
    return %c0_i32, %c0_i32_0 : i32, i32
  }
}

</mosaic_0001>

<llo_original>
// kernel: tpu_custom_call.1
$region0: #{tpu_custom_call.1}
  #allocation0 [shape = 'u32[]', space=smem, size = 0x4, offset = 0x4, fixed_abs, tag = 'smem constant byte address 0x4 - core index']
  #allocation1 [shape = 'u32[72,128]{1,0:T(1,128)}', space=vmem, size = 0x9000, scoped, tag = 'internal scratch']
  %s0 = inlined_call_operand.vmem [shape: f32[64,4], index: 0, kind: input, shape index: {}]
  %s1 = inlined_call_operand.vmem [shape: f32[4,384], index: 1, kind: input, shape index: {}]
  %s2 = inlined_call_operand.vmem [shape: f32[1,384], index: 2, kind: input, shape index: {}]
  %s3 = inlined_call_operand.hbm [shape: f32[128,384], index: 3, kind: input, shape index: {}]
  %s4 = inlined_call_operand.vmem [shape: f32[1,128], index: 4, kind: input, shape index: {}]
  %s5 = inlined_call_operand.hbm [shape: f32[128,128], index: 5, kind: input, shape index: {}]
  %s6 = inlined_call_operand.vmem [shape: f32[1,128], index: 6, kind: input, shape index: {}]
  %s7 = inlined_call_operand.hbm [shape: f32[8,128], index: 7, kind: output, shape index: {}]
  %s8 = sld [smem:[#allocation0]]
  $region46: #{tpu_custom_call.1} parent=0
    _
  %s10 = ssub.s32 1, %s8
  %s11 = scalar_select 0, %s10, %s8
  $region1: #{tpu_custom_call.1} parent=0
    #allocation2 [shape = 'u8[196608]{0}', space=vmem, size = 0x30000, scoped, tag = 'input window, operand 3, single buffered']
    #allocation3 [shape = 's32[1]{0}', space=sflag, size = 0x4, scoped, tag = 'scoped memory for tpu_custom_call.1']
    #allocation4 [shape = 's32[1]{0}', space=sflag, size = 0x4, scoped, tag = 'scoped memory for tpu_custom_call.1']
    #allocation5 [shape = 'u8[65536]{0}', space=vmem, size = 0x10000, scoped, tag = 'input window, operand 5, single buffered']
    #allocation6 [shape = 's32[1]{0}', space=sflag, size = 0x4, scoped, tag = 'scoped memory for tpu_custom_call.1']
    #allocation7 [shape = 'u8[4096]{0}', space=vmem, size = 0x1000, scoped, tag = 'output window, operand 0, single buffered']
    %12 = vsyncpa [#allocation3], 0
    %13 = vsyncpa [#allocation6], 0
    %14 = vsyncpa [#allocation4], 0
    // Predicated region
    $region2: #{tpu_custom_call.1} parent=1 // pred_check
      _
    $region3: #{tpu_custom_call.1} parent=1 // pred_check_branch
      %16 = sbr.rel (0) target = $region5
    $region4: #{tpu_custom_call.1} parent=1 // pred_region
      _
    $region5: #{tpu_custom_call.1} parent=1 // pred_fallthru
      _
    // Predicated region
    $region6: #{tpu_custom_call.1} parent=1 // pred_check
      _
    $region7: #{tpu_custom_call.1} parent=1 // pred_check_branch
      %18 = sbr.rel (0) target = $region9
    $region8: #{tpu_custom_call.1} parent=1 // pred_region
      _
    $region9: #{tpu_custom_call.1} parent=1 // pred_fallthru
      _
    // Predicated region
    $region10: #{tpu_custom_call.1} parent=1 // pred_check
      _
    $region11: #{tpu_custom_call.1} parent=1 // pred_check_branch
      %20 = sbr.rel (0) target = $region13
    $region12: #{tpu_custom_call.1} parent=1 // pred_region
      _
    $region13: #{tpu_custom_call.1} parent=1 // pred_fallthru
      _
    // Predicated region
    $region14: #{tpu_custom_call.1} parent=1 // pred_check
      _
    $region15: #{tpu_custom_call.1} parent=1 // pred_check_branch
      %22 = sbr.rel (0) target = $region17
    $region16: #{tpu_custom_call.1} parent=1 // pred_region
      %24 = vsyncadd [#allocation3], 0
      %s25 = sshll.u32 %s3, 4
      %s26 = int_to_ptr.hbm [resolvable:$true] %s25
      %s27 = sshll.u32 [#allocation2], 4
      %s28 = int_to_ptr.vmem [resolvable:$true] %s27
      %33 = dma.hbm_to_vmem [thread:$0]  %s26, 6144, %s28, [#allocation3], 384, 384, 24
    $region17: #{tpu_custom_call.1} parent=1 // pred_fallthru
      _
    // Predicated region
    $region18: #{tpu_custom_call.1} parent=1 // pred_check
      _
    $region19: #{tpu_custom_call.1} parent=1 // pred_check_branch
      %35 = sbr.rel (0) target = $region21
    $region20: #{tpu_custom_call.1} parent=1 // pred_region
      _
    $region21: #{tpu_custom_call.1} parent=1 // pred_fallthru
      _
    // Predicated region
    $region22: #{tpu_custom_call.1} parent=1 // pred_check
      _
    $region23: #{tpu_custom_call.1} parent=1 // pred_check_branch
      %37 = sbr.rel (0) target = $region25
    $region24: #{tpu_custom_call.1} parent=1 // pred_region
      %39 = vsyncadd [#allocation6], 0
      %s40 = sshll.u32 %s5, 4
      %s41 = int_to_ptr.hbm [resolvable:$true] %s40
      %s42 = sshll.u32 [#allocation5], 4
      %s43 = int_to_ptr.vmem [resolvable:$true] %s42
      %48 = dma.hbm_to_vmem [thread:$0]  %s41, 2048, %s43, [#allocation6], 128, 128, 8
    $region25: #{tpu_custom_call.1} parent=1 // pred_fallthru
      _
    // Predicated region
    $region26: #{tpu_custom_call.1} parent=1 // pred_check
      _
    $region27: #{tpu_custom_call.1} parent=1 // pred_check_branch
      %50 = sbr.rel (0) target = $region29
    $region28: #{tpu_custom_call.1} parent=1 // pred_region
      _
    $region29: #{tpu_custom_call.1} parent=1 // pred_fallthru
      _
    // Predicated region
    $region30: #{tpu_custom_call.1} parent=1 // pred_check
      _
    $region31: #{tpu_custom_call.1} parent=1 // pred_check_branch
      %52 = sbr.rel (0) target = $region33
    $region32: #{tpu_custom_call.1} parent=1 // pred_region
      %54 = dma.done [#allocation3], 6144
    $region33: #{tpu_custom_call.1} parent=1 // pred_fallthru
      _
    // Predicated region
    $region34: #{tpu_custom_call.1} parent=1 // pred_check
      _
    $region35: #{tpu_custom_call.1} parent=1 // pred_check_branch
      %56 = sbr.rel (0) target = $region37
    $region36: #{tpu_custom_call.1} parent=1 // pred_region
      %58 = dma.done [#allocation6], 2048
    $region37: #{tpu_custom_call.1} parent=1 // pred_fallthru
      _
    %v59 = vld [vmem:[%s0] sm:$0xff]
    %v60 = vld [vmem:[%s0 + $0x8] sm:$0xff]
    %v61 = vld [vmem:[%s0 + $0x10] sm:$0xff]
    %v62 = vld [vmem:[%s0 + $0x18] sm:$0xff]
    %v63 = vld [vmem:[%s0 + $0x20] sm:$0xff]
    %v64 = vld [vmem:[%s0 + $0x28] sm:$0xff]
    %v65 = vld [vmem:[%s0 + $0x30] sm:$0xff]
    %v66 = vld [vmem:[%s0 + $0x38] sm:$0xff]
    %v67 = vld [vmem:[%s1] sm:$0xff]
    %v68 = vld [vmem:[%s1 + $0x8] sm:$0xf]
    %v69 = vld [vmem:[%s2] sm:$0x7]
    %v71 = vperm.slane %v69, 0
    %v72 = vperm.slane %v69, 1
    %v73 = vperm.slane %v69, 2
    %79 = vst [vmem:[#allocation1] ss:$2 sm:$0xff] %v67
    %s80 = scalar_lea.vmem [#allocation1], 16
    %81 = vst [vmem:[%s80] ss:$2 sm:$0xff] %v68
    %v82 = vld.sshfl [vmem:[#allocation1] sm:$0xff pattern:$0x75316420]
    %v83 = vld.sshfl [vmem:[#allocation1 + $0x8] sm:$0xff pattern:$0x75316420]
    %v84 = vld.sshfl [vmem:[#allocation1 + $0x10] sm:$0xff pattern:$0x75316420]
    %vm85 = vcmask 31744
    %v87 = vsel %vm85, %v59, 0
    %v90 = vsel %vm85, %v60, 0
    %v93 = vsel %vm85, %v61, 0
    %v96 = vsel %vm85, %v62, 0
    %v99 = vsel %vm85, %v63, 0
    %v102 = vsel %vm85, %v64, 0
    %v105 = vsel %vm85, %v65, 0
    %v108 = vsel %vm85, %v66, 0
    %vm110 = vcmask 1043456
    %v111 = vsel %vm110, %v82, 0
    %v113 = vsel %vm110, %v83, 0
    %v115 = vsel %vm110, %v84, 0
    %117 = vmatpush.msra.mxu0 0.0
    %118 = vmatpush.msra.mxu0 0.0
    %119 = vmatpush.msra.mxu0 0.0
    %120 = vmatpush.msra.mxu0 0.0
    %121 = vmatpush.msra.mxu0 0.0
    %122 = vmatpush.msra.mxu0 0.0
    %123 = vmatpush.msra.mxu0 0.0
    %124 = vmatpush.msra.mxu0 0.0
    %125 = vmatpush.msra.mxu0 0.0
    %126 = vmatpush.msra.mxu0 0.0
    %127 = vmatpush.msra.mxu0 0.0
    %128 = vmatpush.msra.mxu0 0.0
    %129 = vmatpush.msra.mxu0 0.0
    %130 = vmatpush.msra.mxu0 0.0
    %131 = vmatpush.msra.mxu0 0.0
    %132 = vmatpush.msra.mxu0 %v111
    %133 = vmatmul.f32.gmra.mxu0 %v87
    %v134 = vpop.f32.mrf.mxu0
    %v135 = vadd.f32 %v71, %v134
    %136 = vmatmul.f32.gmra.mxu0 %v90
    %v137 = vpop.f32.mrf.mxu0
    %v138 = vadd.f32 %v71, %v137
    %139 = vmatmul.f32.gmra.mxu0 %v93
    %v140 = vpop.f32.mrf.mxu0
    %v141 = vadd.f32 %v71, %v140
    %142 = vmatmul.f32.gmra.mxu0 %v96
    %v143 = vpop.f32.mrf.mxu0
    %v144 = vadd.f32 %v71, %v143
    %145 = vmatmul.f32.gmra.mxu0 %v99
    %v146 = vpop.f32.mrf.mxu0
    %v147 = vadd.f32 %v71, %v146
    %148 = vmatmul.f32.gmra.mxu0 %v102
    %v149 = vpop.f32.mrf.mxu0
    %v150 = vadd.f32 %v71, %v149
    %151 = vmatmul.f32.gmra.mxu0 %v105
    %v152 = vpop.f32.mrf.mxu0
    %v153 = vadd.f32 %v71, %v152
    %154 = vmatmul.f32.gmra.mxu0 %v108
    %v155 = vpop.f32.mrf.mxu0
    %v156 = vadd.f32 %v71, %v155
    %157 = vdwg.mxu0
    %158 = vmatpush.msra.mxu0 0.0
    %159 = vmatpush.msra.mxu0 0.0
    %160 = vmatpush.msra.mxu0 0.0
    %161 = vmatpush.msra.mxu0 0.0
    %162 = vmatpush.msra.mxu0 0.0
    %163 = vmatpush.msra.mxu0 0.0
    %164 = vmatpush.msra.mxu0 0.0
    %165 = vmatpush.msra.mxu0 0.0
    %166 = vmatpush.msra.mxu0 0.0
    %167 = vmatpush.msra.mxu0 0.0
    %168 = vmatpush.msra.mxu0 0.0
    %169 = vmatpush.msra.mxu0 0.0
    %170 = vmatpush.msra.mxu0 0.0
    %171 = vmatpush.msra.mxu0 0.0
    %172 = vmatpush.msra.mxu0 0.0
    %173 = vmatpush.msra.mxu0 %v113
    %174 = vmatmul.f32.gmra.mxu0 %v87
    %v175 = vpop.f32.mrf.mxu0
    %v176 = vadd.f32 %v72, %v175
    %177 = vmatmul.f32.gmra.mxu0 %v90
    %v178 = vpop.f32.mrf.mxu0
    %v179 = vadd.f32 %v72, %v178
    %180 = vmatmul.f32.gmra.mxu0 %v93
    %v181 = vpop.f32.mrf.mxu0
    %v182 = vadd.f32 %v72, %v181
    %183 = vmatmul.f32.gmra.mxu0 %v96
    %v184 = vpop.f32.mrf.mxu0
    %v185 = vadd.f32 %v72, %v184
    %186 = vmatmul.f32.gmra.mxu0 %v99
    %v187 = vpop.f32.mrf.mxu0
    %v188 = vadd.f32 %v72, %v187
    %189 = vmatmul.f32.gmra.mxu0 %v102
    %v190 = vpop.f32.mrf.mxu0
    %v191 = vadd.f32 %v72, %v190
    %192 = vmatmul.f32.gmra.mxu0 %v105
    %v193 = vpop.f32.mrf.mxu0
    %v194 = vadd.f32 %v72, %v193
    %195 = vmatmul.f32.gmra.mxu0 %v108
    %v196 = vpop.f32.mrf.mxu0
    %v197 = vadd.f32 %v72, %v196
    %198 = vdwg.mxu0
    %199 = vmatpush.msra.mxu0 0.0
    %200 = vmatpush.msra.mxu0 0.0
    %201 = vmatpush.msra.mxu0 0.0
    %202 = vmatpush.msra.mxu0 0.0
    %203 = vmatpush.msra.mxu0 0.0
    %204 = vmatpush.msra.mxu0 0.0
    %205 = vmatpush.msra.mxu0 0.0
    %206 = vmatpush.msra.mxu0 0.0
    %207 = vmatpush.msra.mxu0 0.0
    %208 = vmatpush.msra.mxu0 0.0
    %209 = vmatpush.msra.mxu0 0.0
    %210 = vmatpush.msra.mxu0 0.0
    %211 = vmatpush.msra.mxu0 0.0
    %212 = vmatpush.msra.mxu0 0.0
    %213 = vmatpush.msra.mxu0 0.0
    %214 = vmatpush.msra.mxu0 %v115
    %215 = vmatmul.f32.gmra.mxu0 %v87
    %v216 = vpop.f32.mrf.mxu0
    %v217 = vadd.f32 %v73, %v216
    %218 = vmatmul.f32.gmra.mxu0 %v90
    %v219 = vpop.f32.mrf.mxu0
    %v220 = vadd.f32 %v73, %v219
    %221 = vmatmul.f32.gmra.mxu0 %v93
    %v222 = vpop.f32.mrf.mxu0
    %v223 = vadd.f32 %v73, %v222
    %224 = vmatmul.f32.gmra.mxu0 %v96
    %v225 = vpop.f32.mrf.mxu0
    %v226 = vadd.f32 %v73, %v225
    %227 = vmatmul.f32.gmra.mxu0 %v99
    %v228 = vpop.f32.mrf.mxu0
    %v229 = vadd.f32 %v73, %v228
    %230 = vmatmul.f32.gmra.mxu0 %v102
    %v231 = vpop.f32.mrf.mxu0
    %v232 = vadd.f32 %v73, %v231
    %233 = vmatmul.f32.gmra.mxu0 %v105
    %v234 = vpop.f32.mrf.mxu0
    %v235 = vadd.f32 %v73, %v234
    %236 = vmatmul.f32.gmra.mxu0 %v108
    %v237 = vpop.f32.mrf.mxu0
    %v238 = vadd.f32 %v73, %v237
    %239 = vdwg.mxu0
    %v240 = vld [vmem:[#allocation2] sm:$0xff]
    %v241 = vld [vmem:[#allocation2 + $0x8] sm:$0xff]
    %v242 = vld [vmem:[#allocation2 + $0x10] sm:$0xff]
    %v243 = vld [vmem:[#allocation2 + $0x18] sm:$0xff]
    %v244 = vld [vmem:[#allocation2 + $0x20] sm:$0xff]
    %v245 = vld [vmem:[#allocation2 + $0x28] sm:$0xff]
    %v246 = vld [vmem:[#allocation2 + $0x30] sm:$0xff]
    %v247 = vld [vmem:[#allocation2 + $0x38] sm:$0xff]
    %v248 = vld [vmem:[#allocation2 + $0x40] sm:$0xff]
    %v249 = vld [vmem:[#allocation2 + $0x48] sm:$0xff]
    %v250 = vld [vmem:[#allocation2 + $0x50] sm:$0xff]
    %v251 = vld [vmem:[#allocation2 + $0x58] sm:$0xff]
    %v252 = vld [vmem:[#allocation2 + $0x60] sm:$0xff]
    %v253 = vld [vmem:[#allocation2 + $0x68] sm:$0xff]
    %v254 = vld [vmem:[#allocation2 + $0x70] sm:$0xff]
    %v255 = vld [vmem:[#allocation2 + $0x78] sm:$0xff]
    %v256 = vld [vmem:[#allocation2 + $0x80] sm:$0xff]
    %v257 = vld [vmem:[#allocation2 + $0x88] sm:$0xff]
    %v258 = vld [vmem:[#allocation2 + $0x90] sm:$0xff]
    %v259 = vld [vmem:[#allocation2 + $0x98] sm:$0xff]
    %v260 = vld [vmem:[#allocation2 + $0xa0] sm:$0xff]
    %v261 = vld [vmem:[#allocation2 + $0xa8] sm:$0xff]
    %v262 = vld [vmem:[#allocation2 + $0xb0] sm:$0xff]
    %v263 = vld [vmem:[#allocation2 + $0xb8] sm:$0xff]
    %v264 = vld [vmem:[#allocation2 + $0xc0] sm:$0xff]
    %v265 = vld [vmem:[#allocation2 + $0xc8] sm:$0xff]
    %v266 = vld [vmem:[#allocation2 + $0xd0] sm:$0xff]
    %v267 = vld [vmem:[#allocation2 + $0xd8] sm:$0xff]
    %v268 = vld [vmem:[#allocation2 + $0xe0] sm:$0xff]
    %v269 = vld [vmem:[#allocation2 + $0xe8] sm:$0xff]
    %v270 = vld [vmem:[#allocation2 + $0xf0] sm:$0xff]
    %v271 = vld [vmem:[#allocation2 + $0xf8] sm:$0xff]
    %v272 = vld [vmem:[#allocation2 + $0x100] sm:$0xff]
    %v273 = vld [vmem:[#allocation2 + $0x108] sm:$0xff]
    %v274 = vld [vmem:[#allocation2 + $0x110] sm:$0xff]
    %v275 = vld [vmem:[#allocation2 + $0x118] sm:$0xff]
    %v276 = vld [vmem:[#allocation2 + $0x120] sm:$0xff]
    %v277 = vld [vmem:[#allocation2 + $0x128] sm:$0xff]
    %v278 = vld [vmem:[#allocation2 + $0x130] sm:$0xff]
    %v279 = vld [vmem:[#allocation2 + $0x138] sm:$0xff]
    %v280 = vld [vmem:[#allocation2 + $0x140] sm:$0xff]
    %v281 = vld [vmem:[#allocation2 + $0x148] sm:$0xff]
    %v282 = vld [vmem:[#allocation2 + $0x150] sm:$0xff]
    %v283 = vld [vmem:[#allocation2 + $0x158] sm:$0xff]
    %v284 = vld [vmem:[#allocation2 + $0x160] sm:$0xff]
    %v285 = vld [vmem:[#allocation2 + $0x168] sm:$0xff]
    %v286 = vld [vmem:[#allocation2 + $0x170] sm:$0xff]
    %v287 = vld [vmem:[#allocation2 + $0x178] sm:$0xff]
    %v288 = vld [vmem:[%s4] sm:$0x1]
    %289 = vmatpush.msra.mxu0 %v285
    %290 = vmatpush.msra.mxu0 %v282
    %291 = vmatpush.msra.mxu0 %v279
    %292 = vmatpush.msra.mxu0 %v276
    %293 = vmatpush.msra.mxu0 %v273
    %294 = vmatpush.msra.mxu0 %v270
    %295 = vmatpush.msra.mxu0 %v267
    %296 = vmatpush.msra.mxu0 %v264
    %297 = vmatpush.msra.mxu0 %v261
    %298 = vmatpush.msra.mxu0 %v258
    %299 = vmatpush.msra.mxu0 %v255
    %300 = vmatpush.msra.mxu0 %v252
    %301 = vmatpush.msra.mxu0 %v249
    %302 = vmatpush.msra.mxu0 %v246
    %303 = vmatpush.msra.mxu0 %v243
    %304 = vmatpush.msra.mxu0 %v240
    %305 = vmatmul.f32.gmra.mxu0 0.0
    %v306 = vpop.f32.mrf.mxu0
    %v307 = vadd.f32 0.0, %v306
    %308 = vdwg.mxu0
    %309 = vmatpush.msra.mxu0 %v286
    %310 = vmatpush.msra.mxu0 %v283
    %311 = vmatpush.msra.mxu0 %v280
    %312 = vmatpush.msra.mxu0 %v277
    %313 = vmatpush.msra.mxu0 %v274
    %314 = vmatpush.msra.mxu0 %v271
    %315 = vmatpush.msra.mxu0 %v268
    %316 = vmatpush.msra.mxu0 %v265
    %317 = vmatpush.msra.mxu0 %v262
    %318 = vmatpush.msra.mxu0 %v259
    %319 = vmatpush.msra.mxu0 %v256
    %320 = vmatpush.msra.mxu0 %v253
    %321 = vmatpush.msra.mxu0 %v250
    %322 = vmatpush.msra.mxu0 %v247
    %323 = vmatpush.msra.mxu0 %v244
    %324 = vmatpush.msra.mxu0 %v241
    %325 = vmatmul.f32.gmra.mxu0 0.0
    %v326 = vpop.f32.mrf.mxu0
    %v327 = vadd.f32 0.0, %v326
    %328 = vdwg.mxu0
    %329 = vmatpush.msra.mxu0 %v287
    %330 = vmatpush.msra.mxu0 %v284
    %331 = vmatpush.msra.mxu0 %v281
    %332 = vmatpush.msra.mxu0 %v278
    %333 = vmatpush.msra.mxu0 %v275
    %334 = vmatpush.msra.mxu0 %v272
    %335 = vmatpush.msra.mxu0 %v269
    %336 = vmatpush.msra.mxu0 %v266
    %337 = vmatpush.msra.mxu0 %v263
    %338 = vmatpush.msra.mxu0 %v260
    %339 = vmatpush.msra.mxu0 %v257
    %340 = vmatpush.msra.mxu0 %v254
    %341 = vmatpush.msra.mxu0 %v251
    %342 = vmatpush.msra.mxu0 %v248
    %343 = vmatpush.msra.mxu0 %v245
    %344 = vmatpush.msra.mxu0 %v242
    %345 = vmatmul.f32.gmra.mxu0 0.0
    %v346 = vpop.f32.mrf.mxu0
    %v347 = vadd.f32 0.0, %v346
    %348 = vdwg.mxu0
    %v349 = vadd.f32 %v135, %v307
    %v350 = vxor.u32 %v349, 2147483648
    %v351 = vmul.f32 %v350, 1.442695
    %v352 = vpow.pop %v351
    %v353 = vadd.f32 %v352, 1.0
    %v354 = vrcp.pop %v353
    %v355 = vmul.f32 %v353, %v354
    %v356 = vsub.f32 1.0, %v355
    %v357 = vmul.f32 %v354, %v356
    %v358 = vadd.f32 %v354, %v357
    %vm359 = vweird.f32 %v353
    %vm360 = vweird.f32 %v354
    %vm361 = vmor %vm359, %vm360
    %v362 = vsel %vm361, %v354, %v358
    %v363 = vand.u32 2147483647, %v353
    %vm364 = vcmp.eq.f32.partialorder %v363, 8.507059e+37
    %v365 = vand.u32 %v353, 2147483648
    %v366 = vor.u32 1.1754944e-38, %v365
    %v367 = vsel %vm364, %v366, %v362
    %v368 = vmul.f32 1.0, %v367
    %v369 = vadd.f32 %v176, %v327
    %v370 = vxor.u32 %v369, 2147483648
    %v371 = vmul.f32 %v370, 1.442695
    %v372 = vpow.pop %v371
    %v373 = vadd.f32 %v372, 1.0
    %v374 = vrcp.pop %v373
    %v375 = vmul.f32 %v373, %v374
    %v376 = vsub.f32 1.0, %v375
    %v377 = vmul.f32 %v374, %v376
    %v378 = vadd.f32 %v374, %v377
    %vm379 = vweird.f32 %v373
    %vm380 = vweird.f32 %v374
    %vm381 = vmor %vm379, %vm380
    %v382 = vsel %vm381, %v374, %v378
    %v383 = vand.u32 2147483647, %v373
    %vm384 = vcmp.eq.f32.partialorder %v383, 8.507059e+37
    %v385 = vand.u32 %v373, 2147483648
    %v386 = vor.u32 1.1754944e-38, %v385
    %v387 = vsel %vm384, %v386, %v382
    %v388 = vmul.f32 1.0, %v387
    %v390 = vperm.slane %v288, 0
    %v392 = vadd.f32 %v347, %v390
    %v393 = vmul.f32 %v368, %v392
    %v394 = vadd.f32 %v217, %v393
    %v395 = vtanh.pop %v394
    %v396 = vsub.f32 0.0, %v395
    %v397 = vmul.f32 %v388, %v396
    %v398 = vadd.f32 %v395, %v397
    %399 = vmatpush.msra.mxu0 %v285
    %400 = vmatpush.msra.mxu0 %v282
    %401 = vmatpush.msra.mxu0 %v279
    %402 = vmatpush.msra.mxu0 %v276
    %403 = vmatpush.msra.mxu0 %v273
    %404 = vmatpush.msra.mxu0 %v270
    %405 = vmatpush.msra.mxu0 %v267
    %406 = vmatpush.msra.mxu0 %v264
    %407 = vmatpush.msra.mxu0 %v261
    %408 = vmatpush.msra.mxu0 %v258
    %409 = vmatpush.msra.mxu0 %v255
    %410 = vmatpush.msra.mxu0 %v252
    %411 = vmatpush.msra.mxu0 %v249
    %412 = vmatpush.msra.mxu0 %v246
    %413 = vmatpush.msra.mxu0 %v243
    %414 = vmatpush.msra.mxu0 %v240
    %415 = vmatmul.f32.gmra.mxu0 %v398
    %v416 = vpop.f32.mrf.mxu0
    %v417 = vadd.f32 0.0, %v416
    %418 = vdwg.mxu0
    %419 = vmatpush.msra.mxu0 %v286
    %420 = vmatpush.msra.mxu0 %v283
    %421 = vmatpush.msra.mxu0 %v280
    %422 = vmatpush.msra.mxu0 %v277
    %423 = vmatpush.msra.mxu0 %v274
    %424 = vmatpush.msra.mxu0 %v271
    %425 = vmatpush.msra.mxu0 %v268
    %426 = vmatpush.msra.mxu0 %v265
    %427 = vmatpush.msra.mxu0 %v262
    %428 = vmatpush.msra.mxu0 %v259
    %429 = vmatpush.msra.mxu0 %v256
    %430 = vmatpush.msra.mxu0 %v253
    %431 = vmatpush.msra.mxu0 %v250
    %432 = vmatpush.msra.mxu0 %v247
    %433 = vmatpush.msra.mxu0 %v244
    %434 = vmatpush.msra.mxu0 %v241
    %435 = vmatmul.f32.gmra.mxu0 %v398
    %v436 = vpop.f32.mrf.mxu0
    %v437 = vadd.f32 0.0, %v436
    %438 = vdwg.mxu0
    %439 = vmatpush.msra.mxu0 %v287
    %440 = vmatpush.msra.mxu0 %v284
    %441 = vmatpush.msra.mxu0 %v281
    %442 = vmatpush.msra.mxu0 %v278
    %443 = vmatpush.msra.mxu0 %v275
    %444 = vmatpush.msra.mxu0 %v272
    %445 = vmatpush.msra.mxu0 %v269
    %446 = vmatpush.msra.mxu0 %v266
    %447 = vmatpush.msra.mxu0 %v263
    %448 = vmatpush.msra.mxu0 %v260
    %449 = vmatpush.msra.mxu0 %v257
    %450 = vmatpush.msra.mxu0 %v254
    %451 = vmatpush.msra.mxu0 %v251
    %452 = vmatpush.msra.mxu0 %v248
    %453 = vmatpush.msra.mxu0 %v245
    %454 = vmatpush.msra.mxu0 %v242
    %455 = vmatmul.f32.gmra.mxu0 %v398
    %v456 = vpop.f32.mrf.mxu0
    %v457 = vadd.f32 0.0, %v456
    %458 = vdwg.mxu0
    %v459 = vadd.f32 %v138, %v417
    %v460 = vxor.u32 %v459, 2147483648
    %v461 = vmul.f32 %v460, 1.442695
    %v462 = vpow.pop %v461
    %v463 = vadd.f32 %v462, 1.0
    %v464 = vrcp.pop %v463
    %v465 = vmul.f32 %v463, %v464
    %v466 = vsub.f32 1.0, %v465
    %v467 = vmul.f32 %v464, %v466
    %v468 = vadd.f32 %v464, %v467
    %vm469 = vweird.f32 %v463
    %vm470 = vweird.f32 %v464
    %vm471 = vmor %vm469, %vm470
    %v472 = vsel %vm471, %v464, %v468
    %v473 = vand.u32 2147483647, %v463
    %vm474 = vcmp.eq.f32.partialorder %v473, 8.507059e+37
    %v475 = vand.u32 %v463, 2147483648
    %v476 = vor.u32 1.1754944e-38, %v475
    %v477 = vsel %vm474, %v476, %v472
    %v478 = vmul.f32 1.0, %v477
    %v479 = vadd.f32 %v179, %v437
    %v480 = vxor.u32 %v479, 2147483648
    %v481 = vmul.f32 %v480, 1.442695
    %v482 = vpow.pop %v481
    %v483 = vadd.f32 %v482, 1.0
    %v484 = vrcp.pop %v483
    %v485 = vmul.f32 %v483, %v484
    %v486 = vsub.f32 1.0, %v485
    %v487 = vmul.f32 %v484, %v486
    %v488 = vadd.f32 %v484, %v487
    %vm489 = vweird.f32 %v483
    %vm490 = vweird.f32 %v484
    %vm491 = vmor %vm489, %vm490
    %v492 = vsel %vm491, %v484, %v488
    %v493 = vand.u32 2147483647, %v483
    %vm494 = vcmp.eq.f32.partialorder %v493, 8.507059e+37
    %v495 = vand.u32 %v483, 2147483648
    %v496 = vor.u32 1.1754944e-38, %v495
    %v497 = vsel %vm494, %v496, %v492
    %v498 = vmul.f32 1.0, %v497
    %v499 = vadd.f32 %v457, %v390
    %v500 = vmul.f32 %v478, %v499
    %v501 = vadd.f32 %v220, %v500
    %v502 = vtanh.pop %v501
    %v503 = vsub.f32 %v398, %v502
    %v504 = vmul.f32 %v498, %v503
    %v505 = vadd.f32 %v502, %v504
    %506 = vmatpush.msra.mxu0 %v285
    %507 = vmatpush.msra.mxu0 %v282
    %508 = vmatpush.msra.mxu0 %v279
    %509 = vmatpush.msra.mxu0 %v276
    %510 = vmatpush.msra.mxu0 %v273
    %511 = vmatpush.msra.mxu0 %v270
    %512 = vmatpush.msra.mxu0 %v267
    %513 = vmatpush.msra.mxu0 %v264
    %514 = vmatpush.msra.mxu0 %v261
    %515 = vmatpush.msra.mxu0 %v258
    %516 = vmatpush.msra.mxu0 %v255
    %517 = vmatpush.msra.mxu0 %v252
    %518 = vmatpush.msra.mxu0 %v249
    %519 = vmatpush.msra.mxu0 %v246
    %520 = vmatpush.msra.mxu0 %v243
    %521 = vmatpush.msra.mxu0 %v240
    %522 = vmatmul.f32.gmra.mxu0 %v505
    %v523 = vpop.f32.mrf.mxu0
    %v524 = vadd.f32 0.0, %v523
    %525 = vdwg.mxu0
    %526 = vmatpush.msra.mxu0 %v286
    %527 = vmatpush.msra.mxu0 %v283
    %528 = vmatpush.msra.mxu0 %v280
    %529 = vmatpush.msra.mxu0 %v277
    %530 = vmatpush.msra.mxu0 %v274
    %531 = vmatpush.msra.mxu0 %v271
    %532 = vmatpush.msra.mxu0 %v268
    %533 = vmatpush.msra.mxu0 %v265
    %534 = vmatpush.msra.mxu0 %v262
    %535 = vmatpush.msra.mxu0 %v259
    %536 = vmatpush.msra.mxu0 %v256
    %537 = vmatpush.msra.mxu0 %v253
    %538 = vmatpush.msra.mxu0 %v250
    %539 = vmatpush.msra.mxu0 %v247
    %540 = vmatpush.msra.mxu0 %v244
    %541 = vmatpush.msra.mxu0 %v241
    %542 = vmatmul.f32.gmra.mxu0 %v505
    %v543 = vpop.f32.mrf.mxu0
    %v544 = vadd.f32 0.0, %v543
    %545 = vdwg.mxu0
    %546 = vmatpush.msra.mxu0 %v287
    %547 = vmatpush.msra.mxu0 %v284
    %548 = vmatpush.msra.mxu0 %v281
    %549 = vmatpush.msra.mxu0 %v278
    %550 = vmatpush.msra.mxu0 %v275
    %551 = vmatpush.msra.mxu0 %v272
    %552 = vmatpush.msra.mxu0 %v269
    %553 = vmatpush.msra.mxu0 %v266
    %554 = vmatpush.msra.mxu0 %v263
    %555 = vmatpush.msra.mxu0 %v260
    %556 = vmatpush.msra.mxu0 %v257
    %557 = vmatpush.msra.mxu0 %v254
    %558 = vmatpush.msra.mxu0 %v251
    %559 = vmatpush.msra.mxu0 %v248
    %560 = vmatpush.msra.mxu0 %v245
    %561 = vmatpush.msra.mxu0 %v242
    %562 = vmatmul.f32.gmra.mxu0 %v505
    %v563 = vpop.f32.mrf.mxu0
    %v564 = vadd.f32 0.0, %v563
    %565 = vdwg.mxu0
    %v566 = vadd.f32 %v141, %v524
    %v567 = vxor.u32 %v566, 2147483648
    %v568 = vmul.f32 %v567, 1.442695
    %v569 = vpow.pop %v568
    %v570 = vadd.f32 %v569, 1.0
    %v571 = vrcp.pop %v570
    %v572 = vmul.f32 %v570, %v571
    %v573 = vsub.f32 1.0, %v572
    %v574 = vmul.f32 %v571, %v573
    %v575 = vadd.f32 %v571, %v574
    %vm576 = vweird.f32 %v570
    %vm577 = vweird.f32 %v571
    %vm578 = vmor %vm576, %vm577
    %v579 = vsel %vm578, %v571, %v575
    %v580 = vand.u32 2147483647, %v570
    %vm581 = vcmp.eq.f32.partialorder %v580, 8.507059e+37
    %v582 = vand.u32 %v570, 2147483648
    %v583 = vor.u32 1.1754944e-38, %v582
    %v584 = vsel %vm581, %v583, %v579
    %v585 = vmul.f32 1.0, %v584
    %v586 = vadd.f32 %v182, %v544
    %v587 = vxor.u32 %v586, 2147483648
    %v588 = vmul.f32 %v587, 1.442695
    %v589 = vpow.pop %v588
    %v590 = vadd.f32 %v589, 1.0
    %v591 = vrcp.pop %v590
    %v592 = vmul.f32 %v590, %v591
    %v593 = vsub.f32 1.0, %v592
    %v594 = vmul.f32 %v591, %v593
    %v595 = vadd.f32 %v591, %v594
    %vm596 = vweird.f32 %v590
    %vm597 = vweird.f32 %v591
    %vm598 = vmor %vm596, %vm597
    %v599 = vsel %vm598, %v591, %v595
    %v600 = vand.u32 2147483647, %v590
    %vm601 = vcmp.eq.f32.partialorder %v600, 8.507059e+37
    %v602 = vand.u32 %v590, 2147483648
    %v603 = vor.u32 1.1754944e-38, %v602
    %v604 = vsel %vm601, %v603, %v599
    %v605 = vmul.f32 1.0, %v604
    %v606 = vadd.f32 %v564, %v390
    %v607 = vmul.f32 %v585, %v606
    %v608 = vadd.f32 %v223, %v607
    %v609 = vtanh.pop %v608
    %v610 = vsub.f32 %v505, %v609
    %v611 = vmul.f32 %v605, %v610
    %v612 = vadd.f32 %v609, %v611
    %613 = vmatpush.msra.mxu0 %v285
    %614 = vmatpush.msra.mxu0 %v282
    %615 = vmatpush.msra.mxu0 %v279
    %616 = vmatpush.msra.mxu0 %v276
    %617 = vmatpush.msra.mxu0 %v273
    %618 = vmatpush.msra.mxu0 %v270
    %619 = vmatpush.msra.mxu0 %v267
    %620 = vmatpush.msra.mxu0 %v264
    %621 = vmatpush.msra.mxu0 %v261
    %622 = vmatpush.msra.mxu0 %v258
    %623 = vmatpush.msra.mxu0 %v255
    %624 = vmatpush.msra.mxu0 %v252
    %625 = vmatpush.msra.mxu0 %v249
    %626 = vmatpush.msra.mxu0 %v246
    %627 = vmatpush.msra.mxu0 %v243
    %628 = vmatpush.msra.mxu0 %v240
    %629 = vmatmul.f32.gmra.mxu0 %v612
    %v630 = vpop.f32.mrf.mxu0
    %v631 = vadd.f32 0.0, %v630
    %632 = vdwg.mxu0
    %633 = vmatpush.msra.mxu0 %v286
    %634 = vmatpush.msra.mxu0 %v283
    %635 = vmatpush.msra.mxu0 %v280
    %636 = vmatpush.msra.mxu0 %v277
    %637 = vmatpush.msra.mxu0 %v274
    %638 = vmatpush.msra.mxu0 %v271
    %639 = vmatpush.msra.mxu0 %v268
    %640 = vmatpush.msra.mxu0 %v265
    %641 = vmatpush.msra.mxu0 %v262
    %642 = vmatpush.msra.mxu0 %v259
    %643 = vmatpush.msra.mxu0 %v256
    %644 = vmatpush.msra.mxu0 %v253
    %645 = vmatpush.msra.mxu0 %v250
    %646 = vmatpush.msra.mxu0 %v247
    %647 = vmatpush.msra.mxu0 %v244
    %648 = vmatpush.msra.mxu0 %v241
    %649 = vmatmul.f32.gmra.mxu0 %v612
    %v650 = vpop.f32.mrf.mxu0
    %v651 = vadd.f32 0.0, %v650
    %652 = vdwg.mxu0
    %653 = vmatpush.msra.mxu0 %v287
    %654 = vmatpush.msra.mxu0 %v284
    %655 = vmatpush.msra.mxu0 %v281
    %656 = vmatpush.msra.mxu0 %v278
    %657 = vmatpush.msra.mxu0 %v275
    %658 = vmatpush.msra.mxu0 %v272
    %659 = vmatpush.msra.mxu0 %v269
    %660 = vmatpush.msra.mxu0 %v266
    %661 = vmatpush.msra.mxu0 %v263
    %662 = vmatpush.msra.mxu0 %v260
    %663 = vmatpush.msra.mxu0 %v257
    %664 = vmatpush.msra.mxu0 %v254
    %665 = vmatpush.msra.mxu0 %v251
    %666 = vmatpush.msra.mxu0 %v248
    %667 = vmatpush.msra.mxu0 %v245
    %668 = vmatpush.msra.mxu0 %v242
    %669 = vmatmul.f32.gmra.mxu0 %v612
    %v670 = vpop.f32.mrf.mxu0
    %v671 = vadd.f32 0.0, %v670
    %672 = vdwg.mxu0
    %v673 = vadd.f32 %v144, %v631
    %v674 = vxor.u32 %v673, 2147483648
    %v675 = vmul.f32 %v674, 1.442695
    %v676 = vpow.pop %v675
    %v677 = vadd.f32 %v676, 1.0
    %v678 = vrcp.pop %v677
    %v679 = vmul.f32 %v677, %v678
    %v680 = vsub.f32 1.0, %v679
    %v681 = vmul.f32 %v678, %v680
    %v682 = vadd.f32 %v678, %v681
    %vm683 = vweird.f32 %v677
    %vm684 = vweird.f32 %v678
    %vm685 = vmor %vm683, %vm684
    %v686 = vsel %vm685, %v678, %v682
    %v687 = vand.u32 2147483647, %v677
    %vm688 = vcmp.eq.f32.partialorder %v687, 8.507059e+37
    %v689 = vand.u32 %v677, 2147483648
    %v690 = vor.u32 1.1754944e-38, %v689
    %v691 = vsel %vm688, %v690, %v686
    %v692 = vmul.f32 1.0, %v691
    %v693 = vadd.f32 %v185, %v651
    %v694 = vxor.u32 %v693, 2147483648
    %v695 = vmul.f32 %v694, 1.442695
    %v696 = vpow.pop %v695
    %v697 = vadd.f32 %v696, 1.0
    %v698 = vrcp.pop %v697
    %v699 = vmul.f32 %v697, %v698
    %v700 = vsub.f32 1.0, %v699
    %v701 = vmul.f32 %v698, %v700
    %v702 = vadd.f32 %v698, %v701
    %vm703 = vweird.f32 %v697
    %vm704 = vweird.f32 %v698
    %vm705 = vmor %vm703, %vm704
    %v706 = vsel %vm705, %v698, %v702
    %v707 = vand.u32 2147483647, %v697
    %vm708 = vcmp.eq.f32.partialorder %v707, 8.507059e+37
    %v709 = vand.u32 %v697, 2147483648
    %v710 = vor.u32 1.1754944e-38, %v709
    %v711 = vsel %vm708, %v710, %v706
    %v712 = vmul.f32 1.0, %v711
    %v713 = vadd.f32 %v671, %v390
    %v714 = vmul.f32 %v692, %v713
    %v715 = vadd.f32 %v226, %v714
    %v716 = vtanh.pop %v715
    %v717 = vsub.f32 %v612, %v716
    %v718 = vmul.f32 %v712, %v717
    %v719 = vadd.f32 %v716, %v718
    %720 = vmatpush.msra.mxu0 %v285
    %721 = vmatpush.msra.mxu0 %v282
    %722 = vmatpush.msra.mxu0 %v279
    %723 = vmatpush.msra.mxu0 %v276
    %724 = vmatpush.msra.mxu0 %v273
    %725 = vmatpush.msra.mxu0 %v270
    %726 = vmatpush.msra.mxu0 %v267
    %727 = vmatpush.msra.mxu0 %v264
    %728 = vmatpush.msra.mxu0 %v261
    %729 = vmatpush.msra.mxu0 %v258
    %730 = vmatpush.msra.mxu0 %v255
    %731 = vmatpush.msra.mxu0 %v252
    %732 = vmatpush.msra.mxu0 %v249
    %733 = vmatpush.msra.mxu0 %v246
    %734 = vmatpush.msra.mxu0 %v243
    %735 = vmatpush.msra.mxu0 %v240
    %736 = vmatmul.f32.gmra.mxu0 %v719
    %v737 = vpop.f32.mrf.mxu0
    %v738 = vadd.f32 0.0, %v737
    %739 = vdwg.mxu0
    %740 = vmatpush.msra.mxu0 %v286
    %741 = vmatpush.msra.mxu0 %v283
    %742 = vmatpush.msra.mxu0 %v280
    %743 = vmatpush.msra.mxu0 %v277
    %744 = vmatpush.msra.mxu0 %v274
    %745 = vmatpush.msra.mxu0 %v271
    %746 = vmatpush.msra.mxu0 %v268
    %747 = vmatpush.msra.mxu0 %v265
    %748 = vmatpush.msra.mxu0 %v262
    %749 = vmatpush.msra.mxu0 %v259
    %750 = vmatpush.msra.mxu0 %v256
    %751 = vmatpush.msra.mxu0 %v253
    %752 = vmatpush.msra.mxu0 %v250
    %753 = vmatpush.msra.mxu0 %v247
    %754 = vmatpush.msra.mxu0 %v244
    %755 = vmatpush.msra.mxu0 %v241
    %756 = vmatmul.f32.gmra.mxu0 %v719
    %v757 = vpop.f32.mrf.mxu0
    %v758 = vadd.f32 0.0, %v757
    %759 = vdwg.mxu0
    %760 = vmatpush.msra.mxu0 %v287
    %761 = vmatpush.msra.mxu0 %v284
    %762 = vmatpush.msra.mxu0 %v281
    %763 = vmatpush.msra.mxu0 %v278
    %764 = vmatpush.msra.mxu0 %v275
    %765 = vmatpush.msra.mxu0 %v272
    %766 = vmatpush.msra.mxu0 %v269
    %767 = vmatpush.msra.mxu0 %v266
    %768 = vmatpush.msra.mxu0 %v263
    %769 = vmatpush.msra.mxu0 %v260
    %770 = vmatpush.msra.mxu0 %v257
    %771 = vmatpush.msra.mxu0 %v254
    %772 = vmatpush.msra.mxu0 %v251
    %773 = vmatpush.msra.mxu0 %v248
    %774 = vmatpush.msra.mxu0 %v245
    %775 = vmatpush.msra.mxu0 %v242
    %776 = vmatmul.f32.gmra.mxu0 %v719
    %v777 = vpop.f32.mrf.mxu0
    %v778 = vadd.f32 0.0, %v777
    %779 = vdwg.mxu0
    %v780 = vadd.f32 %v147, %v738
    %v781 = vxor.u32 %v780, 2147483648
    %v782 = vmul.f32 %v781, 1.442695
    %v783 = vpow.pop %v782
    %v784 = vadd.f32 %v783, 1.0
    %v785 = vrcp.pop %v784
    %v786 = vmul.f32 %v784, %v785
    %v787 = vsub.f32 1.0, %v786
    %v788 = vmul.f32 %v785, %v787
    %v789 = vadd.f32 %v785, %v788
    %vm790 = vweird.f32 %v784
    %vm791 = vweird.f32 %v785
    %vm792 = vmor %vm790, %vm791
    %v793 = vsel %vm792, %v785, %v789
    %v794 = vand.u32 2147483647, %v784
    %vm795 = vcmp.eq.f32.partialorder %v794, 8.507059e+37
    %v796 = vand.u32 %v784, 2147483648
    %v797 = vor.u32 1.1754944e-38, %v796
    %v798 = vsel %vm795, %v797, %v793
    %v799 = vmul.f32 1.0, %v798
    %v800 = vadd.f32 %v188, %v758
    %v801 = vxor.u32 %v800, 2147483648
    %v802 = vmul.f32 %v801, 1.442695
    %v803 = vpow.pop %v802
    %v804 = vadd.f32 %v803, 1.0
    %v805 = vrcp.pop %v804
    %v806 = vmul.f32 %v804, %v805
    %v807 = vsub.f32 1.0, %v806
    %v808 = vmul.f32 %v805, %v807
    %v809 = vadd.f32 %v805, %v808
    %vm810 = vweird.f32 %v804
    %vm811 = vweird.f32 %v805
    %vm812 = vmor %vm810, %vm811
    %v813 = vsel %vm812, %v805, %v809
    %v814 = vand.u32 2147483647, %v804
    %vm815 = vcmp.eq.f32.partialorder %v814, 8.507059e+37
    %v816 = vand.u32 %v804, 2147483648
    %v817 = vor.u32 1.1754944e-38, %v816
    %v818 = vsel %vm815, %v817, %v813
    %v819 = vmul.f32 1.0, %v818
    %v820 = vadd.f32 %v778, %v390
    %v821 = vmul.f32 %v799, %v820
    %v822 = vadd.f32 %v229, %v821
    %v823 = vtanh.pop %v822
    %v824 = vsub.f32 %v719, %v823
    %v825 = vmul.f32 %v819, %v824
    %v826 = vadd.f32 %v823, %v825
    %827 = vmatpush.msra.mxu0 %v285
    %828 = vmatpush.msra.mxu0 %v282
    %829 = vmatpush.msra.mxu0 %v279
    %830 = vmatpush.msra.mxu0 %v276
    %831 = vmatpush.msra.mxu0 %v273
    %832 = vmatpush.msra.mxu0 %v270
    %833 = vmatpush.msra.mxu0 %v267
    %834 = vmatpush.msra.mxu0 %v264
    %835 = vmatpush.msra.mxu0 %v261
    %836 = vmatpush.msra.mxu0 %v258
    %837 = vmatpush.msra.mxu0 %v255
    %838 = vmatpush.msra.mxu0 %v252
    %839 = vmatpush.msra.mxu0 %v249
    %840 = vmatpush.msra.mxu0 %v246
    %841 = vmatpush.msra.mxu0 %v243
    %842 = vmatpush.msra.mxu0 %v240
    %843 = vmatmul.f32.gmra.mxu0 %v826
    %v844 = vpop.f32.mrf.mxu0
    %v845 = vadd.f32 0.0, %v844
    %846 = vdwg.mxu0
    %847 = vmatpush.msra.mxu0 %v286
    %848 = vmatpush.msra.mxu0 %v283
    %849 = vmatpush.msra.mxu0 %v280
    %850 = vmatpush.msra.mxu0 %v277
    %851 = vmatpush.msra.mxu0 %v274
    %852 = vmatpush.msra.mxu0 %v271
    %853 = vmatpush.msra.mxu0 %v268
    %854 = vmatpush.msra.mxu0 %v265
    %855 = vmatpush.msra.mxu0 %v262
    %856 = vmatpush.msra.mxu0 %v259
    %857 = vmatpush.msra.mxu0 %v256
    %858 = vmatpush.msra.mxu0 %v253
    %859 = vmatpush.msra.mxu0 %v250
    %860 = vmatpush.msra.mxu0 %v247
    %861 = vmatpush.msra.mxu0 %v244
    %862 = vmatpush.msra.mxu0 %v241
    %863 = vmatmul.f32.gmra.mxu0 %v826
    %v864 = vpop.f32.mrf.mxu0
    %v865 = vadd.f32 0.0, %v864
    %866 = vdwg.mxu0
    %867 = vmatpush.msra.mxu0 %v287
    %868 = vmatpush.msra.mxu0 %v284
    %869 = vmatpush.msra.mxu0 %v281
    %870 = vmatpush.msra.mxu0 %v278
    %871 = vmatpush.msra.mxu0 %v275
    %872 = vmatpush.msra.mxu0 %v272
    %873 = vmatpush.msra.mxu0 %v269
    %874 = vmatpush.msra.mxu0 %v266
    %875 = vmatpush.msra.mxu0 %v263
    %876 = vmatpush.msra.mxu0 %v260
    %877 = vmatpush.msra.mxu0 %v257
    %878 = vmatpush.msra.mxu0 %v254
    %879 = vmatpush.msra.mxu0 %v251
    %880 = vmatpush.msra.mxu0 %v248
    %881 = vmatpush.msra.mxu0 %v245
    %882 = vmatpush.msra.mxu0 %v242
    %883 = vmatmul.f32.gmra.mxu0 %v826
    %v884 = vpop.f32.mrf.mxu0
    %v885 = vadd.f32 0.0, %v884
    %886 = vdwg.mxu0
    %v887 = vadd.f32 %v150, %v845
    %v888 = vxor.u32 %v887, 2147483648
    %v889 = vmul.f32 %v888, 1.442695
    %v890 = vpow.pop %v889
    %v891 = vadd.f32 %v890, 1.0
    %v892 = vrcp.pop %v891
    %v893 = vmul.f32 %v891, %v892
    %v894 = vsub.f32 1.0, %v893
    %v895 = vmul.f32 %v892, %v894
    %v896 = vadd.f32 %v892, %v895
    %vm897 = vweird.f32 %v891
    %vm898 = vweird.f32 %v892
    %vm899 = vmor %vm897, %vm898
    %v900 = vsel %vm899, %v892, %v896
    %v901 = vand.u32 2147483647, %v891
    %vm902 = vcmp.eq.f32.partialorder %v901, 8.507059e+37
    %v903 = vand.u32 %v891, 2147483648
    %v904 = vor.u32 1.1754944e-38, %v903
    %v905 = vsel %vm902, %v904, %v900
    %v906 = vmul.f32 1.0, %v905
    %v907 = vadd.f32 %v191, %v865
    %v908 = vxor.u32 %v907, 2147483648
    %v909 = vmul.f32 %v908, 1.442695
    %v910 = vpow.pop %v909
    %v911 = vadd.f32 %v910, 1.0
    %v912 = vrcp.pop %v911
    %v913 = vmul.f32 %v911, %v912
    %v914 = vsub.f32 1.0, %v913
    %v915 = vmul.f32 %v912, %v914
    %v916 = vadd.f32 %v912, %v915
    %vm917 = vweird.f32 %v911
    %vm918 = vweird.f32 %v912
    %vm919 = vmor %vm917, %vm918
    %v920 = vsel %vm919, %v912, %v916
    %v921 = vand.u32 2147483647, %v911
    %vm922 = vcmp.eq.f32.partialorder %v921, 8.507059e+37
    %v923 = vand.u32 %v911, 2147483648
    %v924 = vor.u32 1.1754944e-38, %v923
    %v925 = vsel %vm922, %v924, %v920
    %v926 = vmul.f32 1.0, %v925
    %v927 = vadd.f32 %v885, %v390
    %v928 = vmul.f32 %v906, %v927
    %v929 = vadd.f32 %v232, %v928
    %v930 = vtanh.pop %v929
    %v931 = vsub.f32 %v826, %v930
    %v932 = vmul.f32 %v926, %v931
    %v933 = vadd.f32 %v930, %v932
    %934 = vmatpush.msra.mxu0 %v285
    %935 = vmatpush.msra.mxu0 %v282
    %936 = vmatpush.msra.mxu0 %v279
    %937 = vmatpush.msra.mxu0 %v276
    %938 = vmatpush.msra.mxu0 %v273
    %939 = vmatpush.msra.mxu0 %v270
    %940 = vmatpush.msra.mxu0 %v267
    %941 = vmatpush.msra.mxu0 %v264
    %942 = vmatpush.msra.mxu0 %v261
    %943 = vmatpush.msra.mxu0 %v258
    %944 = vmatpush.msra.mxu0 %v255
    %945 = vmatpush.msra.mxu0 %v252
    %946 = vmatpush.msra.mxu0 %v249
    %947 = vmatpush.msra.mxu0 %v246
    %948 = vmatpush.msra.mxu0 %v243
    %949 = vmatpush.msra.mxu0 %v240
    %950 = vmatmul.f32.gmra.mxu0 %v933
    %v951 = vpop.f32.mrf.mxu0
    %v952 = vadd.f32 0.0, %v951
    %953 = vdwg.mxu0
    %954 = vmatpush.msra.mxu0 %v286
    %955 = vmatpush.msra.mxu0 %v283
    %956 = vmatpush.msra.mxu0 %v280
    %957 = vmatpush.msra.mxu0 %v277
    %958 = vmatpush.msra.mxu0 %v274
    %959 = vmatpush.msra.mxu0 %v271
    %960 = vmatpush.msra.mxu0 %v268
    %961 = vmatpush.msra.mxu0 %v265
    %962 = vmatpush.msra.mxu0 %v262
    %963 = vmatpush.msra.mxu0 %v259
    %964 = vmatpush.msra.mxu0 %v256
    %965 = vmatpush.msra.mxu0 %v253
    %966 = vmatpush.msra.mxu0 %v250
    %967 = vmatpush.msra.mxu0 %v247
    %968 = vmatpush.msra.mxu0 %v244
    %969 = vmatpush.msra.mxu0 %v241
    %970 = vmatmul.f32.gmra.mxu0 %v933
    %v971 = vpop.f32.mrf.mxu0
    %v972 = vadd.f32 0.0, %v971
    %973 = vdwg.mxu0
    %974 = vmatpush.msra.mxu0 %v287
    %975 = vmatpush.msra.mxu0 %v284
    %976 = vmatpush.msra.mxu0 %v281
    %977 = vmatpush.msra.mxu0 %v278
    %978 = vmatpush.msra.mxu0 %v275
    %979 = vmatpush.msra.mxu0 %v272
    %980 = vmatpush.msra.mxu0 %v269
    %981 = vmatpush.msra.mxu0 %v266
    %982 = vmatpush.msra.mxu0 %v263
    %983 = vmatpush.msra.mxu0 %v260
    %984 = vmatpush.msra.mxu0 %v257
    %985 = vmatpush.msra.mxu0 %v254
    %986 = vmatpush.msra.mxu0 %v251
    %987 = vmatpush.msra.mxu0 %v248
    %988 = vmatpush.msra.mxu0 %v245
    %989 = vmatpush.msra.mxu0 %v242
    %990 = vmatmul.f32.gmra.mxu0 %v933
    %v991 = vpop.f32.mrf.mxu0
    %v992 = vadd.f32 0.0, %v991
    %993 = vdwg.mxu0
    %v994 = vadd.f32 %v153, %v952
    %v995 = vxor.u32 %v994, 2147483648
    %v996 = vmul.f32 %v995, 1.442695
    %v997 = vpow.pop %v996
    %v998 = vadd.f32 %v997, 1.0
    %v999 = vrcp.pop %v998
    %v1000 = vmul.f32 %v998, %v999
    %v1001 = vsub.f32 1.0, %v1000
    %v1002 = vmul.f32 %v999, %v1001
    %v1003 = vadd.f32 %v999, %v1002
    %vm1004 = vweird.f32 %v998
    %vm1005 = vweird.f32 %v999
    %vm1006 = vmor %vm1004, %vm1005
    %v1007 = vsel %vm1006, %v999, %v1003
    %v1008 = vand.u32 2147483647, %v998
    %vm1009 = vcmp.eq.f32.partialorder %v1008, 8.507059e+37
    %v1010 = vand.u32 %v998, 2147483648
    %v1011 = vor.u32 1.1754944e-38, %v1010
    %v1012 = vsel %vm1009, %v1011, %v1007
    %v1013 = vmul.f32 1.0, %v1012
    %v1014 = vadd.f32 %v194, %v972
    %v1015 = vxor.u32 %v1014, 2147483648
    %v1016 = vmul.f32 %v1015, 1.442695
    %v1017 = vpow.pop %v1016
    %v1018 = vadd.f32 %v1017, 1.0
    %v1019 = vrcp.pop %v1018
    %v1020 = vmul.f32 %v1018, %v1019
    %v1021 = vsub.f32 1.0, %v1020
    %v1022 = vmul.f32 %v1019, %v1021
    %v1023 = vadd.f32 %v1019, %v1022
    %vm1024 = vweird.f32 %v1018
    %vm1025 = vweird.f32 %v1019
    %vm1026 = vmor %vm1024, %vm1025
    %v1027 = vsel %vm1026, %v1019, %v1023
    %v1028 = vand.u32 2147483647, %v1018
    %vm1029 = vcmp.eq.f32.partialorder %v1028, 8.507059e+37
    %v1030 = vand.u32 %v1018, 2147483648
    %v1031 = vor.u32 1.1754944e-38, %v1030
    %v1032 = vsel %vm1029, %v1031, %v1027
    %v1033 = vmul.f32 1.0, %v1032
    %v1034 = vadd.f32 %v992, %v390
    %v1035 = vmul.f32 %v1013, %v1034
    %v1036 = vadd.f32 %v235, %v1035
    %v1037 = vtanh.pop %v1036
    %v1038 = vsub.f32 %v933, %v1037
    %v1039 = vmul.f32 %v1033, %v1038
    %v1040 = vadd.f32 %v1037, %v1039
    %1041 = vmatpush.msra.mxu0 %v285
    %1042 = vmatpush.msra.mxu0 %v282
    %1043 = vmatpush.msra.mxu0 %v279
    %1044 = vmatpush.msra.mxu0 %v276
    %1045 = vmatpush.msra.mxu0 %v273
    %1046 = vmatpush.msra.mxu0 %v270
    %1047 = vmatpush.msra.mxu0 %v267
    %1048 = vmatpush.msra.mxu0 %v264
    %1049 = vmatpush.msra.mxu0 %v261
    %1050 = vmatpush.msra.mxu0 %v258
    %1051 = vmatpush.msra.mxu0 %v255
    %1052 = vmatpush.msra.mxu0 %v252
    %1053 = vmatpush.msra.mxu0 %v249
    %1054 = vmatpush.msra.mxu0 %v246
    %1055 = vmatpush.msra.mxu0 %v243
    %1056 = vmatpush.msra.mxu0 %v240
    %1057 = vmatmul.f32.gmra.mxu0 %v1040
    %v1058 = vpop.f32.mrf.mxu0
    %v1059 = vadd.f32 0.0, %v1058
    %1060 = vdwg.mxu0
    %1061 = vmatpush.msra.mxu0 %v286
    %1062 = vmatpush.msra.mxu0 %v283
    %1063 = vmatpush.msra.mxu0 %v280
    %1064 = vmatpush.msra.mxu0 %v277
    %1065 = vmatpush.msra.mxu0 %v274
    %1066 = vmatpush.msra.mxu0 %v271
    %1067 = vmatpush.msra.mxu0 %v268
    %1068 = vmatpush.msra.mxu0 %v265
    %1069 = vmatpush.msra.mxu0 %v262
    %1070 = vmatpush.msra.mxu0 %v259
    %1071 = vmatpush.msra.mxu0 %v256
    %1072 = vmatpush.msra.mxu0 %v253
    %1073 = vmatpush.msra.mxu0 %v250
    %1074 = vmatpush.msra.mxu0 %v247
    %1075 = vmatpush.msra.mxu0 %v244
    %1076 = vmatpush.msra.mxu0 %v241
    %1077 = vmatmul.f32.gmra.mxu0 %v1040
    %v1078 = vpop.f32.mrf.mxu0
    %v1079 = vadd.f32 0.0, %v1078
    %1080 = vdwg.mxu0
    %1081 = vmatpush.msra.mxu0 %v287
    %1082 = vmatpush.msra.mxu0 %v284
    %1083 = vmatpush.msra.mxu0 %v281
    %1084 = vmatpush.msra.mxu0 %v278
    %1085 = vmatpush.msra.mxu0 %v275
    %1086 = vmatpush.msra.mxu0 %v272
    %1087 = vmatpush.msra.mxu0 %v269
    %1088 = vmatpush.msra.mxu0 %v266
    %1089 = vmatpush.msra.mxu0 %v263
    %1090 = vmatpush.msra.mxu0 %v260
    %1091 = vmatpush.msra.mxu0 %v257
    %1092 = vmatpush.msra.mxu0 %v254
    %1093 = vmatpush.msra.mxu0 %v251
    %1094 = vmatpush.msra.mxu0 %v248
    %1095 = vmatpush.msra.mxu0 %v245
    %1096 = vmatpush.msra.mxu0 %v242
    %1097 = vmatmul.f32.gmra.mxu0 %v1040
    %v1098 = vpop.f32.mrf.mxu0
    %v1099 = vadd.f32 0.0, %v1098
    %1100 = vdwg.mxu0
    %v1101 = vadd.f32 %v156, %v1059
    %v1102 = vxor.u32 %v1101, 2147483648
    %v1103 = vmul.f32 %v1102, 1.442695
    %v1104 = vpow.pop %v1103
    %v1105 = vadd.f32 %v1104, 1.0
    %v1106 = vrcp.pop %v1105
    %v1107 = vmul.f32 %v1105, %v1106
    %v1108 = vsub.f32 1.0, %v1107
    %v1109 = vmul.f32 %v1106, %v1108
    %v1110 = vadd.f32 %v1106, %v1109
    %vm1111 = vweird.f32 %v1105
    %vm1112 = vweird.f32 %v1106
    %vm1113 = vmor %vm1111, %vm1112
    %v1114 = vsel %vm1113, %v1106, %v1110
    %v1115 = vand.u32 2147483647, %v1105
    %vm1116 = vcmp.eq.f32.partialorder %v1115, 8.507059e+37
    %v1117 = vand.u32 %v1105, 2147483648
    %v1118 = vor.u32 1.1754944e-38, %v1117
    %v1119 = vsel %vm1116, %v1118, %v1114
    %v1120 = vmul.f32 1.0, %v1119
    %v1121 = vadd.f32 %v197, %v1079
    %v1122 = vxor.u32 %v1121, 2147483648
    %v1123 = vmul.f32 %v1122, 1.442695
    %v1124 = vpow.pop %v1123
    %v1125 = vadd.f32 %v1124, 1.0
    %v1126 = vrcp.pop %v1125
    %v1127 = vmul.f32 %v1125, %v1126
    %v1128 = vsub.f32 1.0, %v1127
    %v1129 = vmul.f32 %v1126, %v1128
    %v1130 = vadd.f32 %v1126, %v1129
    %vm1131 = vweird.f32 %v1125
    %vm1132 = vweird.f32 %v1126
    %vm1133 = vmor %vm1131, %vm1132
    %v1134 = vsel %vm1133, %v1126, %v1130
    %v1135 = vand.u32 2147483647, %v1125
    %vm1136 = vcmp.eq.f32.partialorder %v1135, 8.507059e+37
    %v1137 = vand.u32 %v1125, 2147483648
    %v1138 = vor.u32 1.1754944e-38, %v1137
    %v1139 = vsel %vm1136, %v1138, %v1134
    %v1140 = vmul.f32 1.0, %v1139
    %v1141 = vadd.f32 %v1099, %v390
    %v1142 = vmul.f32 %v1120, %v1141
    %v1143 = vadd.f32 %v238, %v1142
    %v1144 = vtanh.pop %v1143
    %v1145 = vsub.f32 %v1040, %v1144
    %v1146 = vmul.f32 %v1140, %v1145
    %v1147 = vadd.f32 %v1144, %v1146
    %v1148 = vld [vmem:[#allocation5] sm:$0xff]
    %v1149 = vld [vmem:[#allocation5 + $0x8] sm:$0xff]
    %v1150 = vld [vmem:[#allocation5 + $0x10] sm:$0xff]
    %v1151 = vld [vmem:[#allocation5 + $0x18] sm:$0xff]
    %v1152 = vld [vmem:[#allocation5 + $0x20] sm:$0xff]
    %v1153 = vld [vmem:[#allocation5 + $0x28] sm:$0xff]
    %v1154 = vld [vmem:[#allocation5 + $0x30] sm:$0xff]
    %v1155 = vld [vmem:[#allocation5 + $0x38] sm:$0xff]
    %v1156 = vld [vmem:[#allocation5 + $0x40] sm:$0xff]
    %v1157 = vld [vmem:[#allocation5 + $0x48] sm:$0xff]
    %v1158 = vld [vmem:[#allocation5 + $0x50] sm:$0xff]
    %v1159 = vld [vmem:[#allocation5 + $0x58] sm:$0xff]
    %v1160 = vld [vmem:[#allocation5 + $0x60] sm:$0xff]
    %v1161 = vld [vmem:[#allocation5 + $0x68] sm:$0xff]
    %v1162 = vld [vmem:[#allocation5 + $0x70] sm:$0xff]
    %v1163 = vld [vmem:[#allocation5 + $0x78] sm:$0xff]
    %v1164 = vld [vmem:[%s6] sm:$0x1]
    %v1166 = vperm.slane %v1164, 0
    %1168 = vmatpush.msra.mxu0 %v1163
    %1169 = vmatpush.msra.mxu0 %v1162
    %1170 = vmatpush.msra.mxu0 %v1161
    %1171 = vmatpush.msra.mxu0 %v1160
    %1172 = vmatpush.msra.mxu0 %v1159
    %1173 = vmatpush.msra.mxu0 %v1158
    %1174 = vmatpush.msra.mxu0 %v1157
    %1175 = vmatpush.msra.mxu0 %v1156
    %1176 = vmatpush.msra.mxu0 %v1155
    %1177 = vmatpush.msra.mxu0 %v1154
    %1178 = vmatpush.msra.mxu0 %v1153
    %1179 = vmatpush.msra.mxu0 %v1152
    %1180 = vmatpush.msra.mxu0 %v1151
    %1181 = vmatpush.msra.mxu0 %v1150
    %1182 = vmatpush.msra.mxu0 %v1149
    %1183 = vmatpush.msra.mxu0 %v1148
    %1184 = vmatmul.f32.gmra.mxu0 %v1147
    %v1185 = vpop.f32.mrf.mxu0
    %v1186 = vadd.f32 %v1166, %v1185
    %1187 = vdwg.mxu0
    %1188 = vst [vmem:[#allocation7] sm:$0xff] %v1186
    // Predicated region
    $region38: #{tpu_custom_call.1} parent=1 // pred_check
      _
    $region39: #{tpu_custom_call.1} parent=1 // pred_check_branch
      %1190 = sbr.rel (0) target = $region41
    $region40: #{tpu_custom_call.1} parent=1 // pred_region
      %1192 = vsyncadd [#allocation4], 0
      %s1194 = sshll.u32 [#allocation7], 4
      %s1195 = int_to_ptr.vmem [resolvable:$true] %s1194
      %s1196 = sshll.u32 %s7, 4
      %s1197 = int_to_ptr.hbm [resolvable:$true] %s1196
      %1199 = dma.vmem_to_hbm [thread:$0]  %s1195, 128, %s1197, [#allocation4]
    $region41: #{tpu_custom_call.1} parent=1 // pred_fallthru
      _
    // Predicated region
    $region42: #{tpu_custom_call.1} parent=1 // pred_check
      _
    $region43: #{tpu_custom_call.1} parent=1 // pred_check_branch
      %1201 = sbr.rel (0) target = $region45
    $region44: #{tpu_custom_call.1} parent=1 // pred_region
      %1203 = dma.done [#allocation4], 128
    $region45: #{tpu_custom_call.1} parent=1 // pred_fallthru
      _
    %1204 = vsyncpa [#allocation3], 1
    %1205 = vsyncpa [#allocation6], 1
    %1206 = vsyncpa [#allocation4], 1

</llo_original>
